<compile_context>
chip_gen: v7x
topology: tpu7x:2x2x1
jax: 0.10.0
libtpu: 0.0.40
codegen_flags: <defaults>
</compile_context>

<pallas_src>
import functools
import math

import jax
import jax.numpy as jnp
from jax.experimental import pallas as pl
from jax.experimental.pallas import tpu as pltpu

# ----------------------------- model hyper-params ---------------------------
B = 2                     # batch
IMG_H, IMG_W = 96, 32     # input image (3-channel NCHW)
C_FEAT = 32               # backbone channels (2048 in the real model)
FH, FW = 24, 8            # backbone feature-map spatial size
HEAT_H, HEAT_W = 48, 16   # raw heat-map spatial size (pooled to 24x8)
NUM_JOINTS = 6            # cfg.MODEL.POSENET.NUM_JOINTS
GROUPS = ((0, 1), (2, 3), (4, 5))   # cfg.MODEL.POSENET.JOINTS_GROUPS
NUM_GROUPS = len(GROUPS)
D_MODEL = C_FEAT          # transformer d_model (2048 in the real model)
NHEAD = 4                 # 8 in the real model
DIM_FF = 64               # 512 in the real model
TEL = 1                   # cfg.MODEL.TEL (num TransformerEncoder layers)
CONF_MID = 16             # 512 in the real model (conf_layer hidden width)

PIXEL_MEAN = (123.675, 116.28, 103.53)
PIXEL_STD = (58.395, 57.12, 57.375)

_NEG_INF = -1e9           # bf16/f32-safe additive-mask sentinel

_BATCH_PARALLEL = pltpu.CompilerParams(dimension_semantics=("parallel",))


# =============================================================================
# Pallas kernels
# =============================================================================
def _masked_pool_kernel(feat_ref, mask_ref, out_ref):
    # feat_ref: (1, HW, C)  mask_ref: (1, P, HW)  out_ref: (1, P, C)
    # Contraction-ready layout: (P, HW) x (HW, C) -> no operand relayout.
    f = feat_ref[0]                                    # (HW, C)
    m = (mask_ref[0] > 0.001).astype(jnp.float32)      # (P, HW)
    hw = f.shape[0]
    # adaptive_avg_pool2d((1,1)) of the masked features == masked sum / (H*W)
    # (reference divides by the full spatial area, not the mask area).
    out_ref[0] = jnp.dot(m, f, preferred_element_type=jnp.float32) * (1.0 / float(hw))


def _encoder_layer_kernel(x_ref, bias_ref, wqkv_ref, bqkv_ref, wo_ref, bo_ref,
                          g1_ref, be1_ref, w1_ref, b1_ref, w2_ref, b2_ref,
                          g2_ref, be2_ref, out_ref, *, nhead):
    # Eval-mode nn.TransformerEncoderLayer (post-norm, relu, dropout=0).
    # x_ref: (chunk, D) packs independent sequences back-to-back on the
    # sublane axis.  bias_ref: (chunk, chunk) block-diagonal additive mask
    # (0 within a sequence, -1e9 across sequences / padding rows).
    # Weight refs are whole, VMEM-resident bf16 matrices / f32 vectors shared
    # by every chunk of the grid (single-buffered, streamed once per call).
    x = x_ref[...]                                     # (chunk, D) f32
    d = x.shape[-1]
    hd = d // nhead
    bias = bias_ref[...]

    x_bf = x.astype(jnp.bfloat16)
    # Fused QKV projection: bf16 operands, f32 accumulation.  The
    # 1/sqrt(head_dim) query scale is pre-folded into the Wq columns.
    qkv = jnp.dot(x_bf, wqkv_ref[...],
                  preferred_element_type=jnp.float32) + bqkv_ref[...]
    qkv_bf = qkv.astype(jnp.bfloat16)

    attn = jnp.zeros_like(x)
    for h in range(nhead):   # unrolled at trace time
        qh = qkv_bf[:, h * hd:(h + 1) * hd]
        kh = qkv_bf[:, d + h * hd:d + (h + 1) * hd]
        vh = qkv_bf[:, 2 * d + h * hd:2 * d + (h + 1) * hd]
        s = jax.lax.dot_general(
            qh, kh, (((1,), (1,)), ((), ())), preferred_element_type=jnp.float32
        ) + bias                                        # f32 scores + f32 mask
        s = s - jnp.max(s, axis=-1, keepdims=True)      # f32 softmax stats
        e = jnp.exp(s)
        p = e * pl.reciprocal(jnp.sum(e, axis=-1, keepdims=True), approx=True)
        oh = jnp.dot(p.astype(jnp.bfloat16), vh,
                     preferred_element_type=jnp.float32)        # (chunk, hd)
        # Per-head out-projection accumulation: avoids a lane-axis concat of
        # the heads and K-tiles Wo per head.
        attn += jnp.dot(oh.astype(jnp.bfloat16),
                        wo_ref[h * hd:(h + 1) * hd, :],
                        preferred_element_type=jnp.float32)
    attn += bo_ref[...]

    def layer_norm(y, gamma, beta):
        mu = jnp.mean(y, axis=-1, keepdims=True)
        var = jnp.mean((y - mu) ** 2, axis=-1, keepdims=True)
        return (y - mu) * jax.lax.rsqrt(var + 1e-5) * gamma + beta

    y = layer_norm(x + attn, g1_ref[...], be1_ref[...])
    ff = jnp.maximum(
        jnp.dot(y.astype(jnp.bfloat16), w1_ref[...],
                preferred_element_type=jnp.float32) + b1_ref[...], 0.0)
    ff = jnp.dot(ff.astype(jnp.bfloat16), w2_ref[...],
                 preferred_element_type=jnp.float32) + b2_ref[...]
    out_ref[...] = layer_norm(y + ff, g2_ref[...], be2_ref[...])


# =============================================================================
# Pallas wrappers
# =============================================================================
def compute_local_features(features, masks):
    # features: (B, C, FH, FW); masks: (B, P, FH, FW) -> (B, P, C)
    b, c, h, w = features.shape
    p = masks.shape[1]
    # One XLA transpose upstream so the kernel sees (HW, C) ready to contract.
    f = jnp.transpose(features.reshape(b, c, h * w), (0, 2, 1))   # (B, HW, C)
    m = masks.reshape(b, p, h * w)
    return pl.pallas_call(
        _masked_pool_kernel,
        out_shape=jax.ShapeDtypeStruct((b, p, c), jnp.float32),
        grid=(b,),
        in_specs=[
            pl.BlockSpec((1, h * w, c), lambda i: (i, 0, 0)),
            pl.BlockSpec((1, p, h * w), lambda i: (i, 0, 0)),
        ],
        out_specs=pl.BlockSpec((1, p, c), lambda i: (i, 0, 0)),
        compiler_params=_BATCH_PARALLEL,
    )(f, m)


_LAYER_KEYS = ("wqkv", "bqkv", "wo", "bo", "g1", "be1",
               "w1", "b1", "w2", "b2", "g2", "be2")


def _encoder_vmem_limit(layer_params, chunk, d):
    # Size the scoped-VMEM limit from the actual footprint (single-buffered
    # weights + double-buffered activation/bias blocks + in-kernel temporaries)
    # instead of a fixed constant, so it scales per TPU generation (v7x has
    # only 64 MiB per-TC VMEM; v5e/v6e defaults of 16/32 MiB are too small at
    # real D_MODEL).
    weight_bytes = sum(int(layer_params[k].size) * layer_params[k].dtype.itemsize
                       for k in _LAYER_KEYS)
    act_bytes = 2 * (2 * chunk * d + chunk * chunk) * 4
    temp_bytes = 8 * chunk * 3 * d * 4 + (8 << 20)
    return int(weight_bytes + act_bytes + temp_bytes)


def _encoder_layer(x2d, bias_chunks, layer_params, chunk, nhead, vmem_limit):
    rows, d = x2d.shape
    num_chunks = rows // chunk
    weights = [layer_params[k] for k in _LAYER_KEYS]
    in_specs = [
        pl.BlockSpec((chunk, d), lambda i: (i, 0)),
        pl.BlockSpec((chunk, chunk), lambda i: (i, 0)),
    ]
    # Un-blocked VMEM-resident weights: one HBM->VMEM DMA per matrix per call,
    # a single VMEM copy shared by every chunk (the pl.Buffered(1) /
    # single-buffered behaviour -- no 2x double-buffered weight footprint).
    # TODO(synk): at real D_MODEL replace these with K-tiled weight-slab
    # streaming (reduction grid axis or pltpu.emit_pipeline).
    in_specs += [pl.BlockSpec(memory_space=pltpu.MemorySpace.VMEM)] * len(weights)
    return pl.pallas_call(
        functools.partial(_encoder_layer_kernel, nhead=nhead),
        out_shape=jax.ShapeDtypeStruct((rows, d), jnp.float32),
        grid=(num_chunks,),
        in_specs=in_specs,
        out_specs=pl.BlockSpec((chunk, d), lambda i: (i, 0)),
        compiler_params=pltpu.CompilerParams(
            # "arbitrary": keep the whole call on one TensorCore so the weight
            # set streams from HBM once.  A megacore "parallel" row split would
            # make each core DMA (and hold) the full weights -- a loss in the
            # weight-streaming-bound regime.
            dimension_semantics=("arbitrary",),
            vmem_limit_bytes=vmem_limit,
        ),
    )(x2d, bias_chunks, *weights)


def agg_forward_merged(x_joint, x_sp, agg_params, nhead):
    """Shared nn.TransformerEncoder over BOTH buckets in ONE call per layer.

    x_joint: (Nj, Sj=2, D) joint-pair sequences
    x_sp:    (Ns, Ss=24, D) stripe / patch sequences
    All sequences are packed onto one sublane axis in chunks of Ss rows; a
    per-chunk block-diagonal additive mask keeps sequences independent, and
    joint rows are padded up to a full chunk (pad rows attend only to
    themselves and are discarded).
    """
    nj, sj, d = x_joint.shape
    ns, ss, _ = x_sp.shape
    chunk = ss
    assert chunk % 8 == 0 and chunk % sj == 0

    rows_j = nj * sj
    pad_j = (-rows_j) % chunk
    rows_j_p = rows_j + pad_j

    xj = x_joint.reshape(rows_j, d)
    if pad_j:
        xj = jnp.concatenate([xj, jnp.zeros((pad_j, d), xj.dtype)], axis=0)
    packed = jnp.concatenate([xj, x_sp.reshape(ns * ss, d)], axis=0)
    rows = rows_j_p + ns * ss
    num_chunks = rows // chunk

    # Per-row sequence ids: joint pairs, unique ids for pad rows, then one id
    # per stripe/patch sequence.  Chunks never straddle a sequence boundary.
    ids_j = jnp.arange(rows_j) // sj
    ids_pad = rows_j + jnp.arange(pad_j)
    ids_s = (rows_j + pad_j) + jnp.arange(ns * ss) // ss
    ids = jnp.concatenate([ids_j, ids_pad, ids_s]).reshape(num_chunks, chunk)
    bias = jnp.where(ids[:, :, None] == ids[:, None, :], 0.0, _NEG_INF)
    bias = bias.astype(jnp.float32).reshape(num_chunks * chunk, chunk)

    vmem_limit = _encoder_vmem_limit(agg_params[0], chunk, d)
    for lp in agg_params:
        packed = _encoder_layer(packed, bias, lp, chunk, nhead, vmem_limit)

    out_j = packed[:rows_j].reshape(nj, sj, d)
    out_s = packed[rows_j_p:].reshape(ns, ss, d)
    return out_j, out_s


# =============================================================================
# JAX glue (pooling / reshapes / tiny reductions — cheaper in XLA than as
# dedicated micro pallas_calls)
# =============================================================================
def adaptive_max_pool2d(x, out_hw):
    b, c, h, w = x.shape
    oh, ow = out_hw
    return x.reshape(b, c, oh, h // oh, ow, w // ow).max(axis=(3, 5))


def adaptive_avg_pool2d(x, out_hw):
    b, c, h, w = x.shape
    oh, ow = out_hw
    return x.reshape(b, c, oh, h // oh, ow, w // ow).mean(axis=(3, 5))


def processor_get_heatmap(maps):
    return adaptive_max_pool2d(maps, (24, 8)), maps


def processor_mask_prosses(masks):
    mask_list = [masks[:, list(g), :, :].max(axis=1, keepdims=True) for g in GROUPS]
    part_masks = jnp.concatenate(mask_list, axis=1)
    b, p = part_masks.shape[:2]
    confs = part_masks.reshape(b, p, -1).max(axis=-1)
    return part_masks, confs


# =============================================================================
# Pirt forward
# =============================================================================
@jax.jit
def pirt_forward(params, batched_images):
    # preprocess_image: sub(mean).div(std); folded into XLA with precomputed 1/std.
    images = (batched_images - params["pixel_mean"]) * params["pixel_inv_std"]

    # TODO(synk): build_backbone (ResNet) is an external registry module; replaced by
    # an adaptive-avg-pool + 1x1 projection stand-in producing (B, C_FEAT, 24, 8).
    img_small = adaptive_avg_pool2d(images, (FH, FW))
    features = jax.nn.relu(jnp.einsum("bchw,cd->bdhw", img_small, params["backbone_w"]))
    b, c, h, w = features.shape

    # TODO(synk): build_posenet is an external frozen module; replaced by a pooled
    # 1x1 projection + sigmoid stand-in producing heat maps (B, NUM_JOINTS, 48, 16).
    img_heat = adaptive_avg_pool2d(images, (HEAT_H, HEAT_W))
    heat_maps = jax.nn.sigmoid(jnp.einsum("bchw,cp->bphw", img_heat, params["posenet_w"]))

    pose_masks, ori_masks = processor_get_heatmap(heat_maps)
    part_masks, confs = processor_mask_prosses(pose_masks)   # noqa: F841 (part_masks)
    cob_masks = pose_masks.max(axis=1, keepdims=True)        # noqa: F841

    # TODO(synk): StripeLayer(2048, 512, 24) is an external module; treated as identity.

    # compute_local_features (Pallas masked pooling) -> (B, P, C)
    local = compute_local_features(features, pose_masks)

    # part_process: groups are the contiguous joint pairs (0,1)(2,3)(4,5), so the
    # (B, P, C) tensor reshapes straight into B*G length-2 sequences.
    x_groups = local.reshape(b * NUM_GROUPS, 2, c)

    # stripe (avg_pool (1,8)) and patch (adaptive_max_pool (6,4)) sequences, S=24.
    stripe = jnp.mean(features, axis=3)                              # (B, C, 24)
    patch = adaptive_max_pool2d(features, (6, 4)).reshape(b, c, -1)  # (B, C, 24)
    sp_in = jnp.transpose(jnp.concatenate([stripe, patch], axis=0), (0, 2, 1))  # (2B,24,C)

    # ONE merged encoder pallas_call per layer over both buckets: the shared
    # weight set streams from HBM once per layer instead of twice.
    x_groups, sp = agg_forward_merged(x_groups, sp_in, params["agg"], NHEAD)

    feats = jnp.mean(x_groups, axis=1).reshape(b, NUM_GROUPS, c)     # (B, G, C)
    feats = jnp.transpose(feats, (0, 2, 1))                          # (B, C, G)

    # conf_layer (Conv1d->ReLU->Conv1d->sigmoid): tiny (C,3) MLP, done in XLA —
    # a pallas_call here only pays launch + sub-128-lane store overhead.
    hid = jax.nn.relu(jnp.einsum("mc,bcg->bmg", params["conf_w1"], feats)
                      + params["conf_b1"])
    std_confs = jax.nn.sigmoid(jnp.einsum("om,bmg->bog", params["conf_w2"], hid)
                               + params["conf_b2"])                  # (B, 1, G)
    cmb = jnp.squeeze(std_confs, axis=1) * confs                     # (B, G)
    confs = cmb / jnp.maximum(jnp.sum(jnp.abs(cmb), axis=1, keepdims=True), 1e-12)
    feats = feats * confs[:, None, :]

    sp = jnp.transpose(sp, (0, 2, 1))[..., None]                     # (2B, C, 24, 1)
    seatures = sp[:b]
    peatures = sp[b:]

    # TODO(synk): build_heads is an external registry module; raw head inputs returned.
    outputs = {
        "seatures": seatures,
        "peatures": peatures,
        "feats": feats,
        "ori_masks": ori_masks,
        "confs": confs,
    }
    return {"outputs": outputs}


# =============================================================================
# deterministic parameter init
# =============================================================================
def init_params(key):
    ks = jax.random.split(key, 8 + TEL)

    def nrm(k, shape, scale):
        return jax.random.normal(k, shape, jnp.float32) * scale

    params = {
        "pixel_mean": jnp.array(PIXEL_MEAN, jnp.float32).reshape(1, 3, 1, 1),
        "pixel_inv_std": 1.0 / jnp.array(PIXEL_STD, jnp.float32).reshape(1, 3, 1, 1),
        "backbone_w": nrm(ks[0], (3, C_FEAT), 0.1),
        "posenet_w": nrm(ks[1], (3, NUM_JOINTS), 0.05),
    }
    hd = D_MODEL // NHEAD
    agg_layers = []
    for i in range(TEL):
        lk = jax.random.split(ks[2 + i], 8)
        wq = nrm(lk[0], (D_MODEL, D_MODEL), 0.05)
        wk = nrm(lk[1], (D_MODEL, D_MODEL), 0.05)
        wv = nrm(lk[2], (D_MODEL, D_MODEL), 0.05)
        agg_layers.append(dict(
            # Fused in-projection, columns ordered [Wq | Wk | Wv].  The
            # 1/sqrt(head_dim) query scale is folded into the Wq columns here
            # (when porting a real checkpoint, fold it into in_proj_weight's
            # q rows / q-bias the same way).  Big matrices stored in bf16;
            # biases and LayerNorm affine params stay f32.
            wqkv=jnp.concatenate(
                [wq * (1.0 / math.sqrt(hd)), wk, wv], axis=1).astype(jnp.bfloat16),
            bqkv=jnp.zeros((1, 3 * D_MODEL), jnp.float32),
            wo=nrm(lk[3], (D_MODEL, D_MODEL), 0.05).astype(jnp.bfloat16),
            bo=jnp.zeros((1, D_MODEL), jnp.float32),
            g1=jnp.ones((1, D_MODEL), jnp.float32),
            be1=jnp.zeros((1, D_MODEL), jnp.float32),
            w1=nrm(lk[4], (D_MODEL, DIM_FF), 0.05).astype(jnp.bfloat16),
            b1=jnp.zeros((1, DIM_FF), jnp.float32),
            w2=nrm(lk[5], (DIM_FF, D_MODEL), 0.05).astype(jnp.bfloat16),
            b2=jnp.zeros((1, D_MODEL), jnp.float32),
            g2=jnp.ones((1, D_MODEL), jnp.float32),
            be2=jnp.zeros((1, D_MODEL), jnp.float32),
        ))
    params["agg"] = agg_layers
    params["conf_w1"] = nrm(ks[2 + TEL], (CONF_MID, D_MODEL), 0.1)
    params["conf_b1"] = jnp.zeros((CONF_MID, 1), jnp.float32)
    params["conf_w2"] = nrm(ks[3 + TEL], (1, CONF_MID), 0.1)
    params["conf_b2"] = jnp.zeros((1, 1), jnp.float32)
    return params


if __name__ == "__main__":
    key = jax.random.PRNGKey(0)
    k_img, k_par = jax.random.split(key)
    images = jax.random.uniform(k_img, (B, 3, IMG_H, IMG_W), jnp.float32, 0.0, 255.0)
    params = init_params(k_par)
    result = pirt_forward(params, images)
    jax.block_until_ready(result)
    outs = result["outputs"]
    assert outs["seatures"].shape == (B, C_FEAT, 24, 1)
    assert outs["peatures"].shape == (B, C_FEAT, 24, 1)
    assert outs["feats"].shape == (B, C_FEAT, NUM_GROUPS)
    assert outs["confs"].shape == (B, NUM_GROUPS)
    assert outs["ori_masks"].shape == (B, NUM_JOINTS, HEAT_H, HEAT_W)
    print("KERNEL_OK")
</pallas_src>

<mosaic_0001>
module attributes {stable_mosaic.version = 11 : i64} {
  func.func @_masked_pool_kernel(%arg0: i32, %arg1: memref<1x192x32xf32, #tpu.memory_space<vmem>>, %arg2: memref<1x6x192xf32, #tpu.memory_space<vmem>>, %arg3: memref<1x6x32xf32, #tpu.memory_space<vmem>>) attributes {dimension_semantics = [#tpu.dimension_semantics<parallel>], iteration_bounds = array<i64: 2>, scalar_prefetch = 0 : i64, scratch_operands = 0 : i64, tpu.core_type = #tpu.core_type<tc>, window_params = [{transform_indices = @transform_0, window_bounds = array<i64: 1, 192, 32>}, {transform_indices = @transform_1, window_bounds = array<i64: 1, 6, 192>}, {transform_indices = @transform_2, window_bounds = array<i64: 1, 6, 32>}]} {
    %c0 = arith.constant 0 : index
    %c0_0 = arith.constant 0 : index
    %c0_1 = arith.constant 0 : index
    %0 = vector.load %arg1[%c0, %c0_0, %c0_1] : memref<1x192x32xf32, #tpu.memory_space<vmem>>, vector<1x192x32xf32>
    %1 = vector.shape_cast %0 : vector<1x192x32xf32> to vector<192x32xf32>
    %c0_2 = arith.constant 0 : index
    %c0_3 = arith.constant 0 : index
    %c0_4 = arith.constant 0 : index
    %2 = vector.load %arg2[%c0_2, %c0_3, %c0_4] : memref<1x6x192xf32, #tpu.memory_space<vmem>>, vector<1x6x192xf32>
    %3 = vector.shape_cast %2 : vector<1x6x192xf32> to vector<6x192xf32>
    %cst = arith.constant 1.000000e-03 : f32
    %4 = vector.broadcast %cst : f32 to vector<6x192xf32>
    %5 = arith.cmpf ogt, %3, %4 : vector<6x192xf32>
    %6 = arith.extui %5 : vector<6x192xi1> to vector<6x192xi32>
    %7 = arith.sitofp %6 : vector<6x192xi32> to vector<6x192xf32>
    %cst_5 = arith.constant dense<0.000000e+00> : vector<6x32xf32>
    %8 = tpu.matmul %7, %1, %cst_5 {dimension_numbers = #tpu.dot_dimension_numbers<[1], [0], [0], [1], [0, 0, 1, 1], [], []>} : vector<6x192xf32>, vector<192x32xf32>, vector<6x32xf32> -> vector<6x32xf32>
    %cst_6 = arith.constant 0.00520833349 : f32
    %9 = vector.broadcast %cst_6 : f32 to vector<6x32xf32>
    %10 = arith.mulf %8, %9 : vector<6x32xf32>
    %c0_7 = arith.constant 0 : index
    %c0_8 = arith.constant 0 : index
    %c0_9 = arith.constant 0 : index
    %11 = vector.load %arg3[%c0_7, %c0_8, %c0_9] : memref<1x6x32xf32, #tpu.memory_space<vmem>>, vector<1x6x32xf32>
    %12 = vector.shape_cast %11 : vector<1x6x32xf32> to vector<6x32xf32>
    %13 = vector.shape_cast %10 : vector<6x32xf32> to vector<1x6x32xf32>
    tpu.vector_store %arg3[%c0_7, %c0_8, %c0_9], %13 {strides = array<i32>} : memref<1x6x32xf32, #tpu.memory_space<vmem>>, vector<1x6x32xf32>,
    return
  }
  func.func @transform_0(%arg0: i32) -> (i32, i32, i32) {
    %c0_i32 = arith.constant 0 : i32
    %c0_i32_0 = arith.constant 0 : i32
    %c0_i32_1 = arith.constant 0 : i32
    return %arg0, %c0_i32, %c0_i32_0 : i32, i32, i32
  }
  func.func @transform_1(%arg0: i32) -> (i32, i32, i32) {
    %c0_i32 = arith.constant 0 : i32
    %c0_i32_0 = arith.constant 0 : i32
    %c0_i32_1 = arith.constant 0 : i32
    return %arg0, %c0_i32, %c0_i32_0 : i32, i32, i32
  }
  func.func @transform_2(%arg0: i32) -> (i32, i32, i32) {
    %c0_i32 = arith.constant 0 : i32
    %c0_i32_0 = arith.constant 0 : i32
    %c0_i32_1 = arith.constant 0 : i32
    return %arg0, %c0_i32, %c0_i32_0 : i32, i32, i32
  }
}

module attributes {stable_mosaic.version = 11 : i64} {
  func.func @_encoder_layer_kernel(%arg0: i32, %arg1: memref<24x32xf32, #tpu.memory_space<vmem>>, %arg2: memref<24x24xf32, #tpu.memory_space<vmem>>, %arg3: memref<32x96xbf16, #tpu.memory_space<vmem>>, %arg4: memref<1x96xf32, #tpu.memory_space<vmem>>, %arg5: memref<32x32xbf16, #tpu.memory_space<vmem>>, %arg6: memref<1x32xf32, #tpu.memory_space<vmem>>, %arg7: memref<1x32xf32, #tpu.memory_space<vmem>>, %arg8: memref<1x32xf32, #tpu.memory_space<vmem>>, %arg9: memref<32x64xbf16, #tpu.memory_space<vmem>>, %arg10: memref<1x64xf32, #tpu.memory_space<vmem>>, %arg11: memref<64x32xbf16, #tpu.memory_space<vmem>>, %arg12: memref<1x32xf32, #tpu.memory_space<vmem>>, %arg13: memref<1x32xf32, #tpu.memory_space<vmem>>, %arg14: memref<1x32xf32, #tpu.memory_space<vmem>>, %arg15: memref<24x32xf32, #tpu.memory_space<vmem>>) attributes {dimension_semantics = [#tpu.dimension_semantics<arbitrary>], iteration_bounds = array<i64: 5>, scalar_prefetch = 0 : i64, scratch_operands = 0 : i64, tpu.core_type = #tpu.core_type<tc>, window_params = [{transform_indices = @transform_0, window_bounds = array<i64: 24, 32>}, {transform_indices = @transform_1, window_bounds = array<i64: 24, 24>}, {pipeline_mode = #tpu.pipeline_mode<synchronous>, transform_indices = @transform_2, window_bounds = array<i64: 32, 96>}, {pipeline_mode = #tpu.pipeline_mode<synchronous>, transform_indices = @transform_3, window_bounds = array<i64: 1, 96>}, {pipeline_mode = #tpu.pipeline_mode<synchronous>, transform_indices = @transform_4, window_bounds = array<i64: 32, 32>}, {pipeline_mode = #tpu.pipeline_mode<synchronous>, transform_indices = @transform_5, window_bounds = array<i64: 1, 32>}, {pipeline_mode = #tpu.pipeline_mode<synchronous>, transform_indices = @transform_6, window_bounds = array<i64: 1, 32>}, {pipeline_mode = #tpu.pipeline_mode<synchronous>, transform_indices = @transform_7, window_bounds = array<i64: 1, 32>}, {pipeline_mode = #tpu.pipeline_mode<synchronous>, transform_indices = @transform_8, window_bounds = array<i64: 32, 64>}, {pipeline_mode = #tpu.pipeline_mode<synchronous>, transform_indices = @transform_9, window_bounds = array<i64: 1, 64>}, {pipeline_mode = #tpu.pipeline_mode<synchronous>, transform_indices = @transform_10, window_bounds = array<i64: 64, 32>}, {pipeline_mode = #tpu.pipeline_mode<synchronous>, transform_indices = @transform_11, window_bounds = array<i64: 1, 32>}, {pipeline_mode = #tpu.pipeline_mode<synchronous>, transform_indices = @transform_12, window_bounds = array<i64: 1, 32>}, {pipeline_mode = #tpu.pipeline_mode<synchronous>, transform_indices = @transform_13, window_bounds = array<i64: 1, 32>}, {transform_indices = @transform_14, window_bounds = array<i64: 24, 32>}]} {
    %c0 = arith.constant 0 : index
    %c0_0 = arith.constant 0 : index
    %0 = vector.load %arg1[%c0, %c0_0] : memref<24x32xf32, #tpu.memory_space<vmem>>, vector<24x32xf32>
    %c0_1 = arith.constant 0 : index
    %c0_2 = arith.constant 0 : index
    %1 = vector.load %arg2[%c0_1, %c0_2] : memref<24x24xf32, #tpu.memory_space<vmem>>, vector<24x24xf32>
    %2 = arith.truncf %0 : vector<24x32xf32> to vector<24x32xbf16>
    %c0_3 = arith.constant 0 : index
    %c0_4 = arith.constant 0 : index
    %3 = vector.load %arg3[%c0_3, %c0_4] : memref<32x96xbf16, #tpu.memory_space<vmem>>, vector<32x96xbf16>
    %cst = arith.constant dense<0.000000e+00> : vector<24x96xf32>
    %4 = tpu.matmul %2, %3, %cst {dimension_numbers = #tpu.dot_dimension_numbers<[1], [0], [0], [1], [0, 0, 1, 1], [], []>} : vector<24x32xbf16>, vector<32x96xbf16>, vector<24x96xf32> -> vector<24x96xf32>
    %c0_5 = arith.constant 0 : index
    %c0_6 = arith.constant 0 : index
    %5 = vector.load %arg4[%c0_5, %c0_6] : memref<1x96xf32, #tpu.memory_space<vmem>>, vector<1x96xf32>
    %6 = vector.broadcast %5 : vector<1x96xf32> to vector<24x96xf32>
    %7 = arith.addf %4, %6 : vector<24x96xf32>
    %8 = arith.truncf %7 : vector<24x96xf32> to vector<24x96xbf16>
    %cst_7 = arith.constant 0.000000e+00 : f32
    %9 = vector.broadcast %cst_7 : f32 to vector<24x32xf32>
    %10 = vector.extract_strided_slice %8 {offsets = [0, 0], sizes = [24, 8], strides = [1, 1]} : vector<24x96xbf16> to vector<24x8xbf16>
    %11 = vector.extract_strided_slice %8 {offsets = [0, 32], sizes = [24, 8], strides = [1, 1]} : vector<24x96xbf16> to vector<24x8xbf16>
    %12 = vector.extract_strided_slice %8 {offsets = [0, 64], sizes = [24, 8], strides = [1, 1]} : vector<24x96xbf16> to vector<24x8xbf16>
    %cst_8 = arith.constant dense<0.000000e+00> : vector<24x24xf32>
    %13 = tpu.matmul %10, %11, %cst_8 {dimension_numbers = #tpu.dot_dimension_numbers<[1], [1], [0], [0], [0, 0, 1, 0], [], []>} : vector<24x8xbf16>, vector<24x8xbf16>, vector<24x24xf32> -> vector<24x24xf32>
    %14 = arith.addf %13, %1 : vector<24x24xf32>
    %cst_9 = arith.constant dense<0xFF800000> : vector<24xf32>
    %15 = vector.multi_reduction <maximumf>, %14, %cst_9 [1] : vector<24x24xf32> to vector<24xf32>
    %16 = vector.shape_cast %15 : vector<24xf32> to vector<24x1xf32>
    %17 = vector.broadcast %16 : vector<24x1xf32> to vector<24x24xf32>
    %18 = arith.subf %14, %17 : vector<24x24xf32>
    %19 = math.exp %18 : vector<24x24xf32>
    %cst_10 = arith.constant dense<0.000000e+00> : vector<24xf32>
    %20 = vector.multi_reduction <add>, %19, %cst_10 [1] : vector<24x24xf32> to vector<24xf32>
    %21 = vector.shape_cast %20 : vector<24xf32> to vector<24x1xf32>
    %22 = tpu.reciprocal %21 {approx = true} : vector<24x1xf32> -> vector<24x1xf32>
    %23 = vector.broadcast %22 : vector<24x1xf32> to vector<24x24xf32>
    %24 = arith.mulf %19, %23 : vector<24x24xf32>
    %25 = arith.truncf %24 : vector<24x24xf32> to vector<24x24xbf16>
    %cst_11 = arith.constant dense<0.000000e+00> : vector<24x8xf32>
    %26 = tpu.matmul %25, %12, %cst_11 {dimension_numbers = #tpu.dot_dimension_numbers<[1], [0], [0], [1], [0, 0, 1, 1], [], []>} : vector<24x24xbf16>, vector<24x8xbf16>, vector<24x8xf32> -> vector<24x8xf32>
    %27 = arith.truncf %26 : vector<24x8xf32> to vector<24x8xbf16>
    %c0_12 = arith.constant 0 : index
    %c0_13 = arith.constant 0 : index
    %28 = vector.load %arg5[%c0_12, %c0_13] : memref<32x32xbf16, #tpu.memory_space<vmem>>, vector<8x32xbf16>
    %cst_14 = arith.constant dense<0.000000e+00> : vector<24x32xf32>
    %29 = tpu.matmul %27, %28, %cst_14 {dimension_numbers = #tpu.dot_dimension_numbers<[1], [0], [0], [1], [0, 0, 1, 1], [], []>} : vector<24x8xbf16>, vector<8x32xbf16>, vector<24x32xf32> -> vector<24x32xf32>
    %30 = arith.addf %9, %29 : vector<24x32xf32>
    %31 = vector.extract_strided_slice %8 {offsets = [0, 8], sizes = [24, 8], strides = [1, 1]} : vector<24x96xbf16> to vector<24x8xbf16>
    %32 = vector.extract_strided_slice %8 {offsets = [0, 40], sizes = [24, 8], strides = [1, 1]} : vector<24x96xbf16> to vector<24x8xbf16>
    %33 = vector.extract_strided_slice %8 {offsets = [0, 72], sizes = [24, 8], strides = [1, 1]} : vector<24x96xbf16> to vector<24x8xbf16>
    %cst_15 = arith.constant dense<0.000000e+00> : vector<24x24xf32>
    %34 = tpu.matmul %31, %32, %cst_15 {dimension_numbers = #tpu.dot_dimension_numbers<[1], [1], [0], [0], [0, 0, 1, 0], [], []>} : vector<24x8xbf16>, vector<24x8xbf16>, vector<24x24xf32> -> vector<24x24xf32>
    %35 = arith.addf %34, %1 : vector<24x24xf32>
    %cst_16 = arith.constant dense<0xFF800000> : vector<24xf32>
    %36 = vector.multi_reduction <maximumf>, %35, %cst_16 [1] : vector<24x24xf32> to vector<24xf32>
    %37 = vector.shape_cast %36 : vector<24xf32> to vector<24x1xf32>
    %38 = vector.broadcast %37 : vector<24x1xf32> to vector<24x24xf32>
    %39 = arith.subf %35, %38 : vector<24x24xf32>
    %40 = math.exp %39 : vector<24x24xf32>
    %cst_17 = arith.constant dense<0.000000e+00> : vector<24xf32>
    %41 = vector.multi_reduction <add>, %40, %cst_17 [1] : vector<24x24xf32> to vector<24xf32>
    %42 = vector.shape_cast %41 : vector<24xf32> to vector<24x1xf32>
    %43 = tpu.reciprocal %42 {approx = true} : vector<24x1xf32> -> vector<24x1xf32>
    %44 = vector.broadcast %43 : vector<24x1xf32> to vector<24x24xf32>
    %45 = arith.mulf %40, %44 : vector<24x24xf32>
    %46 = arith.truncf %45 : vector<24x24xf32> to vector<24x24xbf16>
    %cst_18 = arith.constant dense<0.000000e+00> : vector<24x8xf32>
    %47 = tpu.matmul %46, %33, %cst_18 {dimension_numbers = #tpu.dot_dimension_numbers<[1], [0], [0], [1], [0, 0, 1, 1], [], []>} : vector<24x24xbf16>, vector<24x8xbf16>, vector<24x8xf32> -> vector<24x8xf32>
    %48 = arith.truncf %47 : vector<24x8xf32> to vector<24x8xbf16>
    %c8 = arith.constant 8 : index
    %c0_19 = arith.constant 0 : index
    %49 = vector.load %arg5[%c8, %c0_19] : memref<32x32xbf16, #tpu.memory_space<vmem>>, vector<8x32xbf16>
    %cst_20 = arith.constant dense<0.000000e+00> : vector<24x32xf32>
    %50 = tpu.matmul %48, %49, %cst_20 {dimension_numbers = #tpu.dot_dimension_numbers<[1], [0], [0], [1], [0, 0, 1, 1], [], []>} : vector<24x8xbf16>, vector<8x32xbf16>, vector<24x32xf32> -> vector<24x32xf32>
    %51 = arith.addf %30, %50 : vector<24x32xf32>
    %52 = vector.extract_strided_slice %8 {offsets = [0, 16], sizes = [24, 8], strides = [1, 1]} : vector<24x96xbf16> to vector<24x8xbf16>
    %53 = vector.extract_strided_slice %8 {offsets = [0, 48], sizes = [24, 8], strides = [1, 1]} : vector<24x96xbf16> to vector<24x8xbf16>
    %54 = vector.extract_strided_slice %8 {offsets = [0, 80], sizes = [24, 8], strides = [1, 1]} : vector<24x96xbf16> to vector<24x8xbf16>
    %cst_21 = arith.constant dense<0.000000e+00> : vector<24x24xf32>
    %55 = tpu.matmul %52, %53, %cst_21 {dimension_numbers = #tpu.dot_dimension_numbers<[1], [1], [0], [0], [0, 0, 1, 0], [], []>} : vector<24x8xbf16>, vector<24x8xbf16>, vector<24x24xf32> -> vector<24x24xf32>
    %56 = arith.addf %55, %1 : vector<24x24xf32>
    %cst_22 = arith.constant dense<0xFF800000> : vector<24xf32>
    %57 = vector.multi_reduction <maximumf>, %56, %cst_22 [1] : vector<24x24xf32> to vector<24xf32>
    %58 = vector.shape_cast %57 : vector<24xf32> to vector<24x1xf32>
    %59 = vector.broadcast %58 : vector<24x1xf32> to vector<24x24xf32>
    %60 = arith.subf %56, %59 : vector<24x24xf32>
    %61 = math.exp %60 : vector<24x24xf32>
    %cst_23 = arith.constant dense<0.000000e+00> : vector<24xf32>
    %62 = vector.multi_reduction <add>, %61, %cst_23 [1] : vector<24x24xf32> to vector<24xf32>
    %63 = vector.shape_cast %62 : vector<24xf32> to vector<24x1xf32>
    %64 = tpu.reciprocal %63 {approx = true} : vector<24x1xf32> -> vector<24x1xf32>
    %65 = vector.broadcast %64 : vector<24x1xf32> to vector<24x24xf32>
    %66 = arith.mulf %61, %65 : vector<24x24xf32>
    %67 = arith.truncf %66 : vector<24x24xf32> to vector<24x24xbf16>
    %cst_24 = arith.constant dense<0.000000e+00> : vector<24x8xf32>
    %68 = tpu.matmul %67, %54, %cst_24 {dimension_numbers = #tpu.dot_dimension_numbers<[1], [0], [0], [1], [0, 0, 1, 1], [], []>} : vector<24x24xbf16>, vector<24x8xbf16>, vector<24x8xf32> -> vector<24x8xf32>
    %69 = arith.truncf %68 : vector<24x8xf32> to vector<24x8xbf16>
    %c16 = arith.constant 16 : index
    %c0_25 = arith.constant 0 : index
    %70 = vector.load %arg5[%c16, %c0_25] : memref<32x32xbf16, #tpu.memory_space<vmem>>, vector<8x32xbf16>
    %cst_26 = arith.constant dense<0.000000e+00> : vector<24x32xf32>
    %71 = tpu.matmul %69, %70, %cst_26 {dimension_numbers = #tpu.dot_dimension_numbers<[1], [0], [0], [1], [0, 0, 1, 1], [], []>} : vector<24x8xbf16>, vector<8x32xbf16>, vector<24x32xf32> -> vector<24x32xf32>
    %72 = arith.addf %51, %71 : vector<24x32xf32>
    %73 = vector.extract_strided_slice %8 {offsets = [0, 24], sizes = [24, 8], strides = [1, 1]} : vector<24x96xbf16> to vector<24x8xbf16>
    %74 = vector.extract_strided_slice %8 {offsets = [0, 56], sizes = [24, 8], strides = [1, 1]} : vector<24x96xbf16> to vector<24x8xbf16>
    %75 = vector.extract_strided_slice %8 {offsets = [0, 88], sizes = [24, 8], strides = [1, 1]} : vector<24x96xbf16> to vector<24x8xbf16>
    %cst_27 = arith.constant dense<0.000000e+00> : vector<24x24xf32>
    %76 = tpu.matmul %73, %74, %cst_27 {dimension_numbers = #tpu.dot_dimension_numbers<[1], [1], [0], [0], [0, 0, 1, 0], [], []>} : vector<24x8xbf16>, vector<24x8xbf16>, vector<24x24xf32> -> vector<24x24xf32>
    %77 = arith.addf %76, %1 : vector<24x24xf32>
    %cst_28 = arith.constant dense<0xFF800000> : vector<24xf32>
    %78 = vector.multi_reduction <maximumf>, %77, %cst_28 [1] : vector<24x24xf32> to vector<24xf32>
    %79 = vector.shape_cast %78 : vector<24xf32> to vector<24x1xf32>
    %80 = vector.broadcast %79 : vector<24x1xf32> to vector<24x24xf32>
    %81 = arith.subf %77, %80 : vector<24x24xf32>
    %82 = math.exp %81 : vector<24x24xf32>
    %cst_29 = arith.constant dense<0.000000e+00> : vector<24xf32>
    %83 = vector.multi_reduction <add>, %82, %cst_29 [1] : vector<24x24xf32> to vector<24xf32>
    %84 = vector.shape_cast %83 : vector<24xf32> to vector<24x1xf32>
    %85 = tpu.reciprocal %84 {approx = true} : vector<24x1xf32> -> vector<24x1xf32>
    %86 = vector.broadcast %85 : vector<24x1xf32> to vector<24x24xf32>
    %87 = arith.mulf %82, %86 : vector<24x24xf32>
    %88 = arith.truncf %87 : vector<24x24xf32> to vector<24x24xbf16>
    %cst_30 = arith.constant dense<0.000000e+00> : vector<24x8xf32>
    %89 = tpu.matmul %88, %75, %cst_30 {dimension_numbers = #tpu.dot_dimension_numbers<[1], [0], [0], [1], [0, 0, 1, 1], [], []>} : vector<24x24xbf16>, vector<24x8xbf16>, vector<24x8xf32> -> vector<24x8xf32>
    %90 = arith.truncf %89 : vector<24x8xf32> to vector<24x8xbf16>
    %c24 = arith.constant 24 : index
    %c0_31 = arith.constant 0 : index
    %91 = vector.load %arg5[%c24, %c0_31] : memref<32x32xbf16, #tpu.memory_space<vmem>>, vector<8x32xbf16>
    %cst_32 = arith.constant dense<0.000000e+00> : vector<24x32xf32>
    %92 = tpu.matmul %90, %91, %cst_32 {dimension_numbers = #tpu.dot_dimension_numbers<[1], [0], [0], [1], [0, 0, 1, 1], [], []>} : vector<24x8xbf16>, vector<8x32xbf16>, vector<24x32xf32> -> vector<24x32xf32>
    %93 = arith.addf %72, %92 : vector<24x32xf32>
    %c0_33 = arith.constant 0 : index
    %c0_34 = arith.constant 0 : index
    %94 = vector.load %arg6[%c0_33, %c0_34] : memref<1x32xf32, #tpu.memory_space<vmem>>, vector<1x32xf32>
    %95 = vector.broadcast %94 : vector<1x32xf32> to vector<24x32xf32>
    %96 = arith.addf %93, %95 : vector<24x32xf32>
    %97 = arith.addf %0, %96 : vector<24x32xf32>
    %c0_35 = arith.constant 0 : index
    %c0_36 = arith.constant 0 : index
    %98 = vector.load %arg7[%c0_35, %c0_36] : memref<1x32xf32, #tpu.memory_space<vmem>>, vector<1x32xf32>
    %c0_37 = arith.constant 0 : index
    %c0_38 = arith.constant 0 : index
    %99 = vector.load %arg8[%c0_37, %c0_38] : memref<1x32xf32, #tpu.memory_space<vmem>>, vector<1x32xf32>
    %cst_39 = arith.constant dense<0.000000e+00> : vector<24xf32>
    %100 = vector.multi_reduction <add>, %97, %cst_39 [1] : vector<24x32xf32> to vector<24xf32>
    %101 = vector.shape_cast %100 : vector<24xf32> to vector<24x1xf32>
    %cst_40 = arith.constant 3.200000e+01 : f32
    %102 = vector.broadcast %cst_40 : f32 to vector<24x1xf32>
    %103 = arith.divf %101, %102 : vector<24x1xf32>
    %104 = vector.broadcast %103 : vector<24x1xf32> to vector<24x32xf32>
    %105 = arith.subf %97, %104 : vector<24x32xf32>
    %106 = arith.mulf %105, %105 : vector<24x32xf32>
    %cst_41 = arith.constant dense<0.000000e+00> : vector<24xf32>
    %107 = vector.multi_reduction <add>, %106, %cst_41 [1] : vector<24x32xf32> to vector<24xf32>
    %108 = vector.shape_cast %107 : vector<24xf32> to vector<24x1xf32>
    %cst_42 = arith.constant 3.200000e+01 : f32
    %109 = vector.broadcast %cst_42 : f32 to vector<24x1xf32>
    %110 = arith.divf %108, %109 : vector<24x1xf32>
    %111 = vector.broadcast %103 : vector<24x1xf32> to vector<24x32xf32>
    %112 = arith.subf %97, %111 : vector<24x32xf32>
    %cst_43 = arith.constant 9.99999974E-6 : f32
    %113 = vector.broadcast %cst_43 : f32 to vector<24x1xf32>
    %114 = arith.addf %110, %113 : vector<24x1xf32>
    %115 = math.rsqrt %114 : vector<24x1xf32>
    %116 = vector.broadcast %115 : vector<24x1xf32> to vector<24x32xf32>
    %117 = arith.mulf %112, %116 : vector<24x32xf32>
    %118 = vector.broadcast %98 : vector<1x32xf32> to vector<24x32xf32>
    %119 = arith.mulf %117, %118 : vector<24x32xf32>
    %120 = vector.broadcast %99 : vector<1x32xf32> to vector<24x32xf32>
    %121 = arith.addf %119, %120 : vector<24x32xf32>
    %122 = arith.truncf %121 : vector<24x32xf32> to vector<24x32xbf16>
    %c0_44 = arith.constant 0 : index
    %c0_45 = arith.constant 0 : index
    %123 = vector.load %arg9[%c0_44, %c0_45] : memref<32x64xbf16, #tpu.memory_space<vmem>>, vector<32x64xbf16>
    %cst_46 = arith.constant dense<0.000000e+00> : vector<24x64xf32>
    %124 = tpu.matmul %122, %123, %cst_46 {dimension_numbers = #tpu.dot_dimension_numbers<[1], [0], [0], [1], [0, 0, 1, 1], [], []>} : vector<24x32xbf16>, vector<32x64xbf16>, vector<24x64xf32> -> vector<24x64xf32>
    %c0_47 = arith.constant 0 : index
    %c0_48 = arith.constant 0 : index
    %125 = vector.load %arg10[%c0_47, %c0_48] : memref<1x64xf32, #tpu.memory_space<vmem>>, vector<1x64xf32>
    %126 = vector.broadcast %125 : vector<1x64xf32> to vector<24x64xf32>
    %127 = arith.addf %124, %126 : vector<24x64xf32>
    %cst_49 = arith.constant 0.000000e+00 : f32
    %128 = vector.broadcast %cst_49 : f32 to vector<24x64xf32>
    %129 = arith.maximumf %127, %128 : vector<24x64xf32>
    %130 = arith.truncf %129 : vector<24x64xf32> to vector<24x64xbf16>
    %c0_50 = arith.constant 0 : index
    %c0_51 = arith.constant 0 : index
    %131 = vector.load %arg11[%c0_50, %c0_51] : memref<64x32xbf16, #tpu.memory_space<vmem>>, vector<64x32xbf16>
    %cst_52 = arith.constant dense<0.000000e+00> : vector<24x32xf32>
    %132 = tpu.matmul %130, %131, %cst_52 {dimension_numbers = #tpu.dot_dimension_numbers<[1], [0], [0], [1], [0, 0, 1, 1], [], []>} : vector<24x64xbf16>, vector<64x32xbf16>, vector<24x32xf32> -> vector<24x32xf32>
    %c0_53 = arith.constant 0 : index
    %c0_54 = arith.constant 0 : index
    %133 = vector.load %arg12[%c0_53, %c0_54] : memref<1x32xf32, #tpu.memory_space<vmem>>, vector<1x32xf32>
    %134 = vector.broadcast %133 : vector<1x32xf32> to vector<24x32xf32>
    %135 = arith.addf %132, %134 : vector<24x32xf32>
    %136 = arith.addf %121, %135 : vector<24x32xf32>
    %c0_55 = arith.constant 0 : index
    %c0_56 = arith.constant 0 : index
    %137 = vector.load %arg13[%c0_55, %c0_56] : memref<1x32xf32, #tpu.memory_space<vmem>>, vector<1x32xf32>
    %c0_57 = arith.constant 0 : index
    %c0_58 = arith.constant 0 : index
    %138 = vector.load %arg14[%c0_57, %c0_58] : memref<1x32xf32, #tpu.memory_space<vmem>>, vector<1x32xf32>
    %cst_59 = arith.constant dense<0.000000e+00> : vector<24xf32>
    %139 = vector.multi_reduction <add>, %136, %cst_59 [1] : vector<24x32xf32> to vector<24xf32>
    %140 = vector.shape_cast %139 : vector<24xf32> to vector<24x1xf32>
    %cst_60 = arith.constant 3.200000e+01 : f32
    %141 = vector.broadcast %cst_60 : f32 to vector<24x1xf32>
    %142 = arith.divf %140, %141 : vector<24x1xf32>
    %143 = vector.broadcast %142 : vector<24x1xf32> to vector<24x32xf32>
    %144 = arith.subf %136, %143 : vector<24x32xf32>
    %145 = arith.mulf %144, %144 : vector<24x32xf32>
    %cst_61 = arith.constant dense<0.000000e+00> : vector<24xf32>
    %146 = vector.multi_reduction <add>, %145, %cst_61 [1] : vector<24x32xf32> to vector<24xf32>
    %147 = vector.shape_cast %146 : vector<24xf32> to vector<24x1xf32>
    %cst_62 = arith.constant 3.200000e+01 : f32
    %148 = vector.broadcast %cst_62 : f32 to vector<24x1xf32>
    %149 = arith.divf %147, %148 : vector<24x1xf32>
    %150 = vector.broadcast %142 : vector<24x1xf32> to vector<24x32xf32>
    %151 = arith.subf %136, %150 : vector<24x32xf32>
    %cst_63 = arith.constant 9.99999974E-6 : f32
    %152 = vector.broadcast %cst_63 : f32 to vector<24x1xf32>
    %153 = arith.addf %149, %152 : vector<24x1xf32>
    %154 = math.rsqrt %153 : vector<24x1xf32>
    %155 = vector.broadcast %154 : vector<24x1xf32> to vector<24x32xf32>
    %156 = arith.mulf %151, %155 : vector<24x32xf32>
    %157 = vector.broadcast %137 : vector<1x32xf32> to vector<24x32xf32>
    %158 = arith.mulf %156, %157 : vector<24x32xf32>
    %159 = vector.broadcast %138 : vector<1x32xf32> to vector<24x32xf32>
    %160 = arith.addf %158, %159 : vector<24x32xf32>
    %c0_64 = arith.constant 0 : index
    %c0_65 = arith.constant 0 : index
    %161 = vector.load %arg15[%c0_64, %c0_65] : memref<24x32xf32, #tpu.memory_space<vmem>>, vector<24x32xf32>
    tpu.vector_store %arg15[%c0_64, %c0_65], %160 {strides = array<i32>} : memref<24x32xf32, #tpu.memory_space<vmem>>, vector<24x32xf32>,
    return
  }
  func.func @transform_0(%arg0: i32) -> (i32, i32) {
    %c0_i32 = arith.constant 0 : i32
    %c0_i32_0 = arith.constant 0 : i32
    return %arg0, %c0_i32 : i32, i32
  }
  func.func @transform_1(%arg0: i32) -> (i32, i32) {
    %c0_i32 = arith.constant 0 : i32
    %c0_i32_0 = arith.constant 0 : i32
    return %arg0, %c0_i32 : i32, i32
  }
  func.func @transform_2(%arg0: i32) -> (i32, i32) {
    %c0_i32 = arith.constant 0 : i32
    %c0_i32_0 = arith.constant 0 : i32
    %c0_i32_1 = arith.constant 0 : i32
    return %c0_i32, %c0_i32_0 : i32, i32
  }
  func.func @transform_3(%arg0: i32) -> (i32, i32) {
    %c0_i32 = arith.constant 0 : i32
    %c0_i32_0 = arith.constant 0 : i32
    %c0_i32_1 = arith.constant 0 : i32
    return %c0_i32, %c0_i32_0 : i32, i32
  }
  func.func @transform_4(%arg0: i32) -> (i32, i32) {
    %c0_i32 = arith.constant 0 : i32
    %c0_i32_0 = arith.constant 0 : i32
    %c0_i32_1 = arith.constant 0 : i32
    return %c0_i32, %c0_i32_0 : i32, i32
  }
  func.func @transform_5(%arg0: i32) -> (i32, i32) {
    %c0_i32 = arith.constant 0 : i32
    %c0_i32_0 = arith.constant 0 : i32
    %c0_i32_1 = arith.constant 0 : i32
    return %c0_i32, %c0_i32_0 : i32, i32
  }
  func.func @transform_6(%arg0: i32) -> (i32, i32) {
    %c0_i32 = arith.constant 0 : i32
    %c0_i32_0 = arith.constant 0 : i32
    %c0_i32_1 = arith.constant 0 : i32
    return %c0_i32, %c0_i32_0 : i32, i32
  }
  func.func @transform_7(%arg0: i32) -> (i32, i32) {
    %c0_i32 = arith.constant 0 : i32
    %c0_i32_0 = arith.constant 0 : i32
    %c0_i32_1 = arith.constant 0 : i32
    return %c0_i32, %c0_i32_0 : i32, i32
  }
  func.func @transform_8(%arg0: i32) -> (i32, i32) {
    %c0_i32 = arith.constant 0 : i32
    %c0_i32_0 = arith.constant 0 : i32
    %c0_i32_1 = arith.constant 0 : i32
    return %c0_i32, %c0_i32_0 : i32, i32
  }
  func.func @transform_9(%arg0: i32) -> (i32, i32) {
    %c0_i32 = arith.constant 0 : i32
    %c0_i32_0 = arith.constant 0 : i32
    %c0_i32_1 = arith.constant 0 : i32
    return %c0_i32, %c0_i32_0 : i32, i32
  }
  func.func @transform_10(%arg0: i32) -> (i32, i32) {
    %c0_i32 = arith.constant 0 : i32
    %c0_i32_0 = arith.constant 0 : i32
    %c0_i32_1 = arith.constant 0 : i32
    return %c0_i32, %c0_i32_0 : i32, i32
  }
  func.func @transform_11(%arg0: i32) -> (i32, i32) {
    %c0_i32 = arith.constant 0 : i32
    %c0_i32_0 = arith.constant 0 : i32
    %c0_i32_1 = arith.constant 0 : i32
    return %c0_i32, %c0_i32_0 : i32, i32
  }
  func.func @transform_12(%arg0: i32) -> (i32, i32) {
    %c0_i32 = arith.constant 0 : i32
    %c0_i32_0 = arith.constant 0 : i32
    %c0_i32_1 = arith.constant 0 : i32
    return %c0_i32, %c0_i32_0 : i32, i32
  }
  func.func @transform_13(%arg0: i32) -> (i32, i32) {
    %c0_i32 = arith.constant 0 : i32
    %c0_i32_0 = arith.constant 0 : i32
    %c0_i32_1 = arith.constant 0 : i32
    return %c0_i32, %c0_i32_0 : i32, i32
  }
  func.func @transform_14(%arg0: i32) -> (i32, i32) {
    %c0_i32 = arith.constant 0 : i32
    %c0_i32_0 = arith.constant 0 : i32
    return %arg0, %c0_i32 : i32, i32
  }
}

</mosaic_0001>

<llo_original>
// kernel: pirt_forward.2
$region0: #{pirt_forward.2}
  #allocation0 [shape = 'u32[]', space=smem, size = 0x4, offset = 0x4, fixed_abs, tag = 'smem constant byte address 0x4 - core index']
  #allocation1 [shape = 'u32[144,128]{1,0:T(1,128)}', space=vmem, size = 0x12000, scoped, tag = 'internal scratch']
  %s0 = inlined_call_operand.vmem [shape: f32[2,192,32], index: 0, kind: input, shape index: {}]
  %s1 = inlined_call_operand.vmem [shape: f32[2,6,192], index: 1, kind: input, shape index: {}]
  %s2 = inlined_call_operand.vmem [shape: f32[2,6,32], index: 2, kind: output, shape index: {}]
  %s3 = sld [smem:[#allocation0]]
  $region41: #{pirt_forward.2} parent=0
    _
  %s5 = ssub.s32 1, %s3
  %s6 = scalar_select 0, %s5, %s3
  loop: start=0, step=1, limit=4
  $region2: #{pirt_forward.2} parent=0 // loop_pre_header
    _
  $region3: #{pirt_forward.2} parent=0 // loop_header
    %s8 = sphi 0, %s12
    %p9 = scmp.ge.s32.totalorder %s8, 4
    %s18 = sphi 0, %s20
    %s21 = sphi 0, %s18
    %s22 = sphi 0, %s21
    %s38 = sphi 0, %s22
    %s44 = sphi 0, %s46
    %s47 = sphi 0, %s44
    %s48 = sphi 0, %s47
    %s64 = sphi 0, %s48
    %s70 = sphi 0, %s72
    %s73 = sphi 0, %s70
    %s74 = sphi 0, %s73
    %s90 = sphi 0, %s74
  $region4: #{pirt_forward.2} parent=0 // loop_header_branch
    %11 = sbr.rel (%p9) target = $region8
  $region5: #{pirt_forward.2} parent=0 // loop_body
    %s13 = ssub.s32 %s8, 1
    %s14 = ssub.s32 %s8, 2
    %s15 = sadd.s32 %s8, 1
    %s16 = ssub.s32 %s8, %s15
    %p17 = scmp.eq.s32.totalorder %s16, 0
    %s19 = sadd.s32 %s18, 1
    %s20 = scalar_select %p17, %s18, %s19
    %p23 = pneg %p17
    %p24 = scmp.eq.s32.totalorder %s8, 1
    %p25 = por %p23, %p24
    %p26 = scmp.ne.s32.totalorder %s18, %s21
    %p27 = scmp.eq.s32.totalorder %s8, 0
    %p28 = por %p26, %p27
    %p29 = scmp.ne.s32.totalorder %s18, %s21
    %p30 = scmp.eq.s32.totalorder %s13, 1
    %p31 = por %p29, %p30
    %p32 = scmp.ne.s32.totalorder %s21, %s22
    %p33 = scmp.eq.s32.totalorder %s13, 0
    %p34 = por %p32, %p33
    %p35 = scmp.ne.s32.totalorder %s21, %s22
    %p36 = scmp.eq.s32.totalorder %s14, 1
    %p37 = por %p35, %p36
    %p39 = scmp.ne.s32.totalorder %s22, %s38
    %p40 = scmp.eq.s32.totalorder %s14, 0
    %p41 = por %p39, %p40
    %s42 = ssub.s32 %s8, %s15
    %p43 = scmp.eq.s32.totalorder %s42, 0
    %s45 = sadd.s32 %s44, 1
    %s46 = scalar_select %p43, %s44, %s45
    %p49 = pneg %p43
    %p50 = scmp.eq.s32.totalorder %s8, 1
    %p51 = por %p49, %p50
    %p52 = scmp.ne.s32.totalorder %s44, %s47
    %p53 = scmp.eq.s32.totalorder %s8, 0
    %p54 = por %p52, %p53
    %p55 = scmp.ne.s32.totalorder %s44, %s47
    %p56 = scmp.eq.s32.totalorder %s13, 1
    %p57 = por %p55, %p56
    %p58 = scmp.ne.s32.totalorder %s47, %s48
    %p59 = scmp.eq.s32.totalorder %s13, 0
    %p60 = por %p58, %p59
    %p61 = scmp.ne.s32.totalorder %s47, %s48
    %p62 = scmp.eq.s32.totalorder %s14, 1
    %p63 = por %p61, %p62
    %p65 = scmp.ne.s32.totalorder %s48, %s64
    %p66 = scmp.eq.s32.totalorder %s14, 0
    %p67 = por %p65, %p66
    %s68 = ssub.s32 %s8, %s15
    %p69 = scmp.eq.s32.totalorder %s68, 0
    %s71 = sadd.s32 %s70, 1
    %s72 = scalar_select %p69, %s70, %s71
    %p75 = pneg %p69
    %p76 = scmp.eq.s32.totalorder %s8, 1
    %p77 = por %p75, %p76
    %p78 = scmp.ne.s32.totalorder %s70, %s73
    %p79 = scmp.eq.s32.totalorder %s8, 0
    %p80 = por %p78, %p79
    %p81 = scmp.ne.s32.totalorder %s70, %s73
    %p82 = scmp.eq.s32.totalorder %s13, 1
    %p83 = por %p81, %p82
    %p84 = scmp.ne.s32.totalorder %s73, %s74
    %p85 = scmp.eq.s32.totalorder %s13, 0
    %p86 = por %p84, %p85
    %p87 = scmp.ne.s32.totalorder %s73, %s74
    %p88 = scmp.eq.s32.totalorder %s14, 1
    %p89 = por %p87, %p88
    %p91 = scmp.ne.s32.totalorder %s74, %s90
    %p92 = scmp.eq.s32.totalorder %s14, 0
    %p93 = por %p91, %p92
    %p94 = scmp.le.s32.totalorder 1, %s8
    %p95 = scmp.lt.s32.totalorder %s8, 3
    %p96 = pnand %p94, %p95
    %p97 = pneg %p96
    // Predicated region
    $region9: #{pirt_forward.2} parent=5 // pred_check
      _
    $region10: #{pirt_forward.2} parent=5 // pred_check_branch
      %99 = sbr.rel (%p96) target = $region12
    $region11: #{pirt_forward.2} parent=5 // pred_region
      %s100 = ssub.s32 %s8, 1
    $region12: #{pirt_forward.2} parent=5 // pred_fallthru
      _
    %p101 = scmp.lt.s32.totalorder %s8, 2
    // Predicated region
    $region13: #{pirt_forward.2} parent=5 // pred_check
      %p102 = pneg %p101
    $region14: #{pirt_forward.2} parent=5 // pred_check_branch
      %104 = sbr.rel (%p102) target = $region16
    $region15: #{pirt_forward.2} parent=5 // pred_region
      // Predicated region
      $region17: #{pirt_forward.2} parent=15 // pred_check
        %p105 = pneg %p28
      $region18: #{pirt_forward.2} parent=15 // pred_check_branch
        %107 = sbr.rel (%p105) target = $region20
      $region19: #{pirt_forward.2} parent=15 // pred_region
        %p108 = scmp.lt.s32.totalorder %s8, 1
        %s109 = scalar_select %p108, %s8, 1
        %s110 = smul.addr %s109, 24
        %s111 = smul.addr %s110, 8
        %s112 = scalar_lea.vmem %s0, %s111
      $region20: #{pirt_forward.2} parent=15 // pred_fallthru
        _
      // Predicated region
      $region21: #{pirt_forward.2} parent=15 // pred_check
        %p113 = pneg %p54
      $region22: #{pirt_forward.2} parent=15 // pred_check_branch
        %115 = sbr.rel (%p113) target = $region24
      $region23: #{pirt_forward.2} parent=15 // pred_region
        %p116 = scmp.lt.s32.totalorder %s8, 1
        %s117 = scalar_select %p116, %s8, 1
        %s118 = smul.addr %s117, 2
        %s119 = smul.addr %s118, 8
        %s120 = scalar_lea.vmem %s1, %s119
      $region24: #{pirt_forward.2} parent=15 // pred_fallthru
        _
    $region16: #{pirt_forward.2} parent=5 // pred_fallthru
      _
    %p121 = scmp.le.s32.totalorder 1, %s8
    %p122 = scmp.lt.s32.totalorder %s8, 3
    %p123 = pnand %p121, %p122
    %p124 = pneg %p123
    // Predicated region
    $region25: #{pirt_forward.2} parent=5 // pred_check
      _
    $region26: #{pirt_forward.2} parent=5 // pred_check_branch
      %126 = sbr.rel (%p123) target = $region28
    $region27: #{pirt_forward.2} parent=5 // pred_region
      %s127 = ssub.s32 %s8, 1
      %p128 = scmp.lt.s32.totalorder %s13, 1
      %s129 = scalar_select %p128, %s13, 1
      %s130 = smul.addr %s129, 24
      %s131 = smul.addr %s130, 8
      %s132 = scalar_lea.vmem %s0, %s131
      %p133 = pneg %p34
      %p134 = pneg %p31
      %p135 = scmp.lt.s32.totalorder %s13, 1
      %s136 = scalar_select %p135, %s13, 1
      %s137 = smul.addr %s136, 2
      %s138 = smul.addr %s137, 8
      %s139 = scalar_lea.vmem %s1, %s138
      %p140 = pneg %p60
      %p141 = pneg %p57
      %p142 = pneg %p86
      %p143 = pneg %p83
      %p144 = scmp.lt.s32.totalorder %s13, 1
      %s145 = scalar_select %p144, %s13, 1
      %s146 = smul.addr %s145, 8
      %s147 = scalar_lea.vmem %s2, %s146
      %p148 = scmp.lt.s32.totalorder %s13, 1
      %s149 = scalar_select %p148, %s13, 1
      %s150 = smul.addr %s149, 24
      %s151 = smul.addr %s150, 8
      %s152 = scalar_lea.vmem %s0, %s151
      %p153 = scmp.lt.s32.totalorder %s13, 1
      %s154 = scalar_select %p153, %s13, 1
      %s155 = smul.addr %s154, 2
      %s156 = smul.addr %s155, 8
      %s157 = scalar_lea.vmem %s1, %s156
      %p158 = scmp.lt.s32.totalorder %s13, 1
      %s159 = scalar_select %p158, %s13, 1
      %s160 = smul.addr %s159, 8
      %s161 = scalar_lea.vmem %s2, %s160
      %v162 = vld [vmem:[%s152] sm:$0xff]
      %v163 = vld [vmem:[%s152 + $0x8] sm:$0xff]
      %v164 = vld [vmem:[%s152 + $0x10] sm:$0xff]
      %v165 = vld [vmem:[%s152 + $0x18] sm:$0xff]
      %v166 = vld [vmem:[%s152 + $0x20] sm:$0xff]
      %v167 = vld [vmem:[%s152 + $0x28] sm:$0xff]
      %v168 = vld [vmem:[%s152 + $0x30] sm:$0xff]
      %v169 = vld [vmem:[%s152 + $0x38] sm:$0xff]
      %v170 = vld [vmem:[%s152 + $0x40] sm:$0xff]
      %v171 = vld [vmem:[%s152 + $0x48] sm:$0xff]
      %v172 = vld [vmem:[%s152 + $0x50] sm:$0xff]
      %v173 = vld [vmem:[%s152 + $0x58] sm:$0xff]
      %v174 = vld [vmem:[%s152 + $0x60] sm:$0xff]
      %v175 = vld [vmem:[%s152 + $0x68] sm:$0xff]
      %v176 = vld [vmem:[%s152 + $0x70] sm:$0xff]
      %v177 = vld [vmem:[%s152 + $0x78] sm:$0xff]
      %v178 = vld [vmem:[%s152 + $0x80] sm:$0xff]
      %v179 = vld [vmem:[%s152 + $0x88] sm:$0xff]
      %v180 = vld [vmem:[%s152 + $0x90] sm:$0xff]
      %v181 = vld [vmem:[%s152 + $0x98] sm:$0xff]
      %v182 = vld [vmem:[%s152 + $0xa0] sm:$0xff]
      %v183 = vld [vmem:[%s152 + $0xa8] sm:$0xff]
      %v184 = vld [vmem:[%s152 + $0xb0] sm:$0xff]
      %v185 = vld [vmem:[%s152 + $0xb8] sm:$0xff]
      %v186 = vld [vmem:[%s157] sm:$0x3f]
      %v187 = vld [vmem:[%s157 + $0x8] sm:$0x3f]
      %vm188 = vcmp.gt.f32.partialorder %v186, 0.001
      %vm189 = vcmp.gt.f32.partialorder %v187, 0.001
      %v190 = vsel %vm188, 1, 0
      %v191 = vsel %vm189, 1, 0
      %v192 = vcvt.s32.f32 %v190
      %v193 = vcvt.s32.f32 %v191
      %vm194 = vcmask 523264
      %v196 = vsel %vm194, %v193, 0
      %198 = vmatprep.subr.mxu0 0.0
      %199 = vmatpush1.msra.mxu0 %v162
      %200 = vmatprep.subr.mxu0 0.0
      %201 = vmatpush1.msra.mxu0 %v163
      %202 = vmatprep.subr.mxu0 0.0
      %203 = vmatpush1.msra.mxu0 %v164
      %204 = vmatprep.subr.mxu0 0.0
      %205 = vmatpush1.msra.mxu0 %v165
      %206 = vmatprep.subr.mxu0 0.0
      %207 = vmatpush1.msra.mxu0 %v166
      %208 = vmatprep.subr.mxu0 0.0
      %209 = vmatpush1.msra.mxu0 %v167
      %210 = vmatprep.subr.mxu0 0.0
      %211 = vmatpush1.msra.mxu0 %v168
      %212 = vmatprep.subr.mxu0 0.0
      %213 = vmatpush1.msra.mxu0 %v169
      %214 = vmatprep.subr.mxu0 0.0
      %215 = vmatpush1.msra.mxu0 %v170
      %216 = vmatprep.subr.mxu0 0.0
      %217 = vmatpush1.msra.mxu0 %v171
      %218 = vmatprep.subr.mxu0 0.0
      %219 = vmatpush1.msra.mxu0 %v172
      %220 = vmatprep.subr.mxu0 0.0
      %221 = vmatpush1.msra.mxu0 %v173
      %222 = vmatprep.subr.mxu0 0.0
      %223 = vmatpush1.msra.mxu0 %v174
      %224 = vmatprep.subr.mxu0 0.0
      %225 = vmatpush1.msra.mxu0 %v175
      %226 = vmatprep.subr.mxu0 0.0
      %227 = vmatpush1.msra.mxu0 %v176
      %228 = vmatprep.subr.mxu0 0.0
      %229 = vmatpush1.msra.mxu0 %v177
      %230 = vmatprep.subr.mxu0 0.0
      %231 = vmatpush1.msra.mxu0 %v178
      %232 = vmatprep.subr.mxu0 0.0
      %233 = vmatpush1.msra.mxu0 %v179
      %234 = vmatprep.subr.mxu0 0.0
      %235 = vmatpush1.msra.mxu0 %v180
      %236 = vmatprep.subr.mxu0 0.0
      %237 = vmatpush1.msra.mxu0 %v181
      %238 = vmatprep.subr.mxu0 0.0
      %239 = vmatpush1.msra.mxu0 %v182
      %240 = vmatprep.subr.mxu0 0.0
      %241 = vmatpush1.msra.mxu0 %v183
      %242 = vmatprep.subr.mxu0 0.0
      %243 = vmatpush1.msra.mxu0 %v184
      %244 = vmatprep.subr.mxu0 0.0
      %245 = vmatpush1.msra.mxu0 %v185
      %246 = vmatprep.subr.mxu0 0.0
      %247 = vmatpush1.msra.mxu0 0.0
      %248 = vmatprep.subr.mxu0 0.0
      %249 = vmatpush1.msra.mxu0 0.0
      %250 = vmatprep.subr.mxu0 0.0
      %251 = vmatpush1.msra.mxu0 0.0
      %252 = vmatprep.subr.mxu0 0.0
      %253 = vmatpush1.msra.mxu0 0.0
      %254 = vmatprep.subr.mxu0 0.0
      %255 = vmatpush1.msra.mxu0 0.0
      %256 = vmatprep.subr.mxu0 0.0
      %257 = vmatpush1.msra.mxu0 0.0
      %258 = vmatprep.subr.mxu0 0.0
      %259 = vmatpush1.msra.mxu0 0.0
      %260 = vmatprep.subr.mxu0 0.0
      %261 = vmatpush1.msra.mxu0 0.0
      %262 = vmatprep.mubr.f32.mxu0 %v196
      %263 = vmatmul.mubr.f32.gmra.mrb[0].mxu0 %v192
      %v264 = vpop.f32.mrb[0].mxu0
      %v265 = vadd.f32 0.0, %v264
      %v266 = vpop.f32.mrb[0].mxu0
      %267 = vdwg.mxu0
      %v268 = vmul.f32 %v265, 0.0052083335
      %vm269 = vcmask 259072
      %270 = vst.msk [vmem:[%s161] sm:$0x3f] %vm269, %v268
      %p271 = scmp.lt.s32.totalorder %s13, 1
      %s272 = scalar_select %p271, %s13, 1
      %s273 = smul.addr %s272, 8
      %s274 = scalar_lea.vmem %s2, %s273
      // Predicated region
      $region29: #{pirt_forward.2} parent=27 // pred_check
        %p275 = pneg %p83
      $region30: #{pirt_forward.2} parent=27 // pred_check_branch
        %277 = sbr.rel (%p275) target = $region32
      $region31: #{pirt_forward.2} parent=27 // pred_region
        _
      $region32: #{pirt_forward.2} parent=27 // pred_fallthru
        _
    $region28: #{pirt_forward.2} parent=5 // pred_fallthru
      _
    %p278 = scmp.le.s32.totalorder 2, %s8
    // Predicated region
    $region33: #{pirt_forward.2} parent=5 // pred_check
      %p279 = pneg %p278
    $region34: #{pirt_forward.2} parent=5 // pred_check_branch
      %281 = sbr.rel (%p279) target = $region36
    $region35: #{pirt_forward.2} parent=5 // pred_region
      %s282 = ssub.s32 %s8, 2
      // Predicated region
      $region37: #{pirt_forward.2} parent=35 // pred_check
        %p283 = pneg %p89
      $region38: #{pirt_forward.2} parent=35 // pred_check_branch
        %285 = sbr.rel (%p283) target = $region40
      $region39: #{pirt_forward.2} parent=35 // pred_region
        %p286 = scmp.lt.s32.totalorder %s14, 1
        %s287 = scalar_select %p286, %s14, 1
        %s288 = smul.addr %s287, 8
        %s289 = scalar_lea.vmem %s2, %s288
      $region40: #{pirt_forward.2} parent=35 // pred_fallthru
        _
    $region36: #{pirt_forward.2} parent=5 // pred_fallthru
      _
  $region6: #{pirt_forward.2} parent=0 // loop_footer
    %s12 = sadd.s32 1, %s8
  $region7: #{pirt_forward.2} parent=0 // loop_footer_branch
    %7 = sbr.rel target = $region3
  $region8: #{pirt_forward.2} parent=0 // loop_exit
    _

// kernel: eq.11
$region0: #{eq.11}
  %s0 = inlined_call_operand.vmem [shape: s32[120], index: 0, kind: input, shape index: {}]
  %s1 = inlined_call_operand.vmem [shape: s32[5,24], index: 1, kind: output, shape index: {}]
  $region1: #{eq.11} parent=0
    #allocation0 [shape = 'u8[4096]{0}', space=vmem, size = 0x1000, scoped, tag = 'scoped mem for input reshape']
    %s3 = sshllo.u32 0, 1
    %v4 = vld [vmem:[%s0] sm:%s3]
    %5 = vst [vmem:[#allocation0] sm:%s3] %v4
    %v6 = vld [vmem:[#allocation0] sm:$0x1]
    %vm7 = vcmask 195584
    %8 = vst.msk [vmem:[%s1] sm:$0x1] %vm7, %v6
    %v9 = vld [vmem:[#allocation0] sm:$0x1]
    %10 = vrot.lane.b32.xlu0 %v9, 104
    %v11 = vpop.permute.xlu0 %10
    %vm12 = vcmask 195584
    %s13 = scalar_lea.vmem %s1, 1
    %14 = vst.msk [vmem:[%s13] sm:$0x1] %vm12, %v11
    %v15 = vld [vmem:[#allocation0] sm:$0x1]
    %16 = vrot.lane.b32.xlu0 %v15, 80
    %v17 = vpop.permute.xlu0 %16
    %vm18 = vcmask 195584
    %s19 = scalar_lea.vmem %s1, 2
    %20 = vst.msk [vmem:[%s19] sm:$0x1] %vm18, %v17
    %v21 = vld [vmem:[#allocation0] sm:$0x1]
    %22 = vrot.lane.b32.xlu0 %v21, 56
    %v23 = vpop.permute.xlu0 %22
    %vm24 = vcmask 195584
    %s25 = scalar_lea.vmem %s1, 3
    %26 = vst.msk [vmem:[%s25] sm:$0x1] %vm24, %v23
    %v27 = vld [vmem:[#allocation0] sm:$0x1]
    %28 = vrot.lane.b32.xlu0 %v27, 32
    %v29 = vpop.permute.xlu0 %28
    %vm30 = vcmask 195584
    %s31 = scalar_lea.vmem %s1, 4
    %32 = vst.msk [vmem:[%s31] sm:$0x1] %vm30, %v29

// kernel: pirt_forward.3
$region0: #{pirt_forward.3}
  #allocation0 [shape = 'u32[]', space=smem, size = 0x4, offset = 0x4, fixed_abs, tag = 'smem constant byte address 0x4 - core index']
  #allocation1 [shape = 'u32[144,128]{1,0:T(1,128)}', space=vmem, size = 0x12000, scoped, tag = 'internal scratch']
  %s0 = inlined_call_operand.vmem [shape: f32[120,32], index: 0, kind: input, shape index: {}]
  %s1 = inlined_call_operand.vmem [shape: f32[120,24], index: 1, kind: input, shape index: {}]
  %s2 = inlined_call_operand.vmem [shape: bf16[32,96], index: 2, kind: input, shape index: {}]
  %s3 = inlined_call_operand.vmem [shape: f32[1,96], index: 3, kind: input, shape index: {}]
  %s4 = inlined_call_operand.vmem [shape: bf16[32,32], index: 4, kind: input, shape index: {}]
  %s5 = inlined_call_operand.vmem [shape: f32[1,32], index: 5, kind: input, shape index: {}]
  %s6 = inlined_call_operand.vmem [shape: f32[1,32], index: 6, kind: input, shape index: {}]
  %s7 = inlined_call_operand.vmem [shape: f32[1,32], index: 7, kind: input, shape index: {}]
  %s8 = inlined_call_operand.vmem [shape: bf16[32,64], index: 8, kind: input, shape index: {}]
  %s9 = inlined_call_operand.vmem [shape: f32[1,64], index: 9, kind: input, shape index: {}]
  %s10 = inlined_call_operand.vmem [shape: bf16[64,32], index: 10, kind: input, shape index: {}]
  %s11 = inlined_call_operand.vmem [shape: f32[1,32], index: 11, kind: input, shape index: {}]
  %s12 = inlined_call_operand.vmem [shape: f32[1,32], index: 12, kind: input, shape index: {}]
  %s13 = inlined_call_operand.vmem [shape: f32[1,32], index: 13, kind: input, shape index: {}]
  %s14 = inlined_call_operand.vmem [shape: f32[120,32], index: 14, kind: output, shape index: {}]
  %s15 = sld [smem:[#allocation0]]
  $region89: #{pirt_forward.3} parent=0
    _
  %s17 = ssub.s32 1, %s15
  %s18 = scalar_select 0, %s17, %s15
  loop: start=0, step=1, limit=7
  $region2: #{pirt_forward.3} parent=0 // loop_pre_header
    _
  $region3: #{pirt_forward.3} parent=0 // loop_header
    %s20 = sphi 0, %s24
    %p21 = scmp.ge.s32.totalorder %s20, 7
    %s30 = sphi 0, %s32
    %s33 = sphi 0, %s30
    %s34 = sphi 0, %s33
    %s50 = sphi 0, %s34
    %s56 = sphi 0, %s58
    %s59 = sphi 0, %s56
    %s60 = sphi 0, %s59
    %s76 = sphi 0, %s60
    %s80 = sphi 0, %s80
    %s82 = sphi 0, %s80
    %s83 = sphi 0, %s82
    %s97 = sphi 0, %s83
    %s101 = sphi 0, %s101
    %s103 = sphi 0, %s101
    %s104 = sphi 0, %s103
    %s118 = sphi 0, %s104
    %s122 = sphi 0, %s122
    %s124 = sphi 0, %s122
    %s125 = sphi 0, %s124
    %s139 = sphi 0, %s125
    %s143 = sphi 0, %s143
    %s145 = sphi 0, %s143
    %s146 = sphi 0, %s145
    %s160 = sphi 0, %s146
    %s164 = sphi 0, %s164
    %s166 = sphi 0, %s164
    %s167 = sphi 0, %s166
    %s181 = sphi 0, %s167
    %s185 = sphi 0, %s185
    %s187 = sphi 0, %s185
    %s188 = sphi 0, %s187
    %s202 = sphi 0, %s188
    %s206 = sphi 0, %s206
    %s208 = sphi 0, %s206
    %s209 = sphi 0, %s208
    %s223 = sphi 0, %s209
    %s227 = sphi 0, %s227
    %s229 = sphi 0, %s227
    %s230 = sphi 0, %s229
    %s244 = sphi 0, %s230
    %s248 = sphi 0, %s248
    %s250 = sphi 0, %s248
    %s251 = sphi 0, %s250
    %s265 = sphi 0, %s251
    %s269 = sphi 0, %s269
    %s271 = sphi 0, %s269
    %s272 = sphi 0, %s271
    %s286 = sphi 0, %s272
    %s290 = sphi 0, %s290
    %s292 = sphi 0, %s290
    %s293 = sphi 0, %s292
    %s307 = sphi 0, %s293
    %s311 = sphi 0, %s311
    %s313 = sphi 0, %s311
    %s314 = sphi 0, %s313
    %s328 = sphi 0, %s314
    %s334 = sphi 0, %s336
    %s337 = sphi 0, %s334
    %s338 = sphi 0, %s337
    %s354 = sphi 0, %s338
  $region4: #{pirt_forward.3} parent=0 // loop_header_branch
    %23 = sbr.rel (%p21) target = $region8
  $region5: #{pirt_forward.3} parent=0 // loop_body
    %s25 = ssub.s32 %s20, 1
    %s26 = ssub.s32 %s20, 2
    %s27 = sadd.s32 %s20, 1
    %s28 = ssub.s32 %s20, %s27
    %p29 = scmp.eq.s32.totalorder %s28, 0
    %s31 = sadd.s32 %s30, 1
    %s32 = scalar_select %p29, %s30, %s31
    %p35 = pneg %p29
    %p36 = scmp.eq.s32.totalorder %s20, 4
    %p37 = por %p35, %p36
    %p38 = scmp.ne.s32.totalorder %s30, %s33
    %p39 = scmp.eq.s32.totalorder %s20, 0
    %p40 = por %p38, %p39
    %p41 = scmp.ne.s32.totalorder %s30, %s33
    %p42 = scmp.eq.s32.totalorder %s25, 4
    %p43 = por %p41, %p42
    %p44 = scmp.ne.s32.totalorder %s33, %s34
    %p45 = scmp.eq.s32.totalorder %s25, 0
    %p46 = por %p44, %p45
    %p47 = scmp.ne.s32.totalorder %s33, %s34
    %p48 = scmp.eq.s32.totalorder %s26, 4
    %p49 = por %p47, %p48
    %p51 = scmp.ne.s32.totalorder %s34, %s50
    %p52 = scmp.eq.s32.totalorder %s26, 0
    %p53 = por %p51, %p52
    %s54 = ssub.s32 %s20, %s27
    %p55 = scmp.eq.s32.totalorder %s54, 0
    %s57 = sadd.s32 %s56, 1
    %s58 = scalar_select %p55, %s56, %s57
    %p61 = pneg %p55
    %p62 = scmp.eq.s32.totalorder %s20, 4
    %p63 = por %p61, %p62
    %p64 = scmp.ne.s32.totalorder %s56, %s59
    %p65 = scmp.eq.s32.totalorder %s20, 0
    %p66 = por %p64, %p65
    %p67 = scmp.ne.s32.totalorder %s56, %s59
    %p68 = scmp.eq.s32.totalorder %s25, 4
    %p69 = por %p67, %p68
    %p70 = scmp.ne.s32.totalorder %s59, %s60
    %p71 = scmp.eq.s32.totalorder %s25, 0
    %p72 = por %p70, %p71
    %p73 = scmp.ne.s32.totalorder %s59, %s60
    %p74 = scmp.eq.s32.totalorder %s26, 4
    %p75 = por %p73, %p74
    %p77 = scmp.ne.s32.totalorder %s60, %s76
    %p78 = scmp.eq.s32.totalorder %s26, 0
    %p79 = por %p77, %p78
    %s81 = sadd.s32 %s80, 1
    %p84 = scmp.eq.s32.totalorder %s20, 4
    %p85 = scmp.ne.s32.totalorder %s80, %s82
    %p86 = scmp.eq.s32.totalorder %s20, 0
    %p87 = por %p85, %p86
    %p88 = scmp.ne.s32.totalorder %s80, %s82
    %p89 = scmp.eq.s32.totalorder %s25, 4
    %p90 = por %p88, %p89
    %p91 = scmp.ne.s32.totalorder %s82, %s83
    %p92 = scmp.eq.s32.totalorder %s25, 0
    %p93 = por %p91, %p92
    %p94 = scmp.ne.s32.totalorder %s82, %s83
    %p95 = scmp.eq.s32.totalorder %s26, 4
    %p96 = por %p94, %p95
    %p98 = scmp.ne.s32.totalorder %s83, %s97
    %p99 = scmp.eq.s32.totalorder %s26, 0
    %p100 = por %p98, %p99
    %s102 = sadd.s32 %s101, 1
    %p105 = scmp.eq.s32.totalorder %s20, 4
    %p106 = scmp.ne.s32.totalorder %s101, %s103
    %p107 = scmp.eq.s32.totalorder %s20, 0
    %p108 = por %p106, %p107
    %p109 = scmp.ne.s32.totalorder %s101, %s103
    %p110 = scmp.eq.s32.totalorder %s25, 4
    %p111 = por %p109, %p110
    %p112 = scmp.ne.s32.totalorder %s103, %s104
    %p113 = scmp.eq.s32.totalorder %s25, 0
    %p114 = por %p112, %p113
    %p115 = scmp.ne.s32.totalorder %s103, %s104
    %p116 = scmp.eq.s32.totalorder %s26, 4
    %p117 = por %p115, %p116
    %p119 = scmp.ne.s32.totalorder %s104, %s118
    %p120 = scmp.eq.s32.totalorder %s26, 0
    %p121 = por %p119, %p120
    %s123 = sadd.s32 %s122, 1
    %p126 = scmp.eq.s32.totalorder %s20, 4
    %p127 = scmp.ne.s32.totalorder %s122, %s124
    %p128 = scmp.eq.s32.totalorder %s20, 0
    %p129 = por %p127, %p128
    %p130 = scmp.ne.s32.totalorder %s122, %s124
    %p131 = scmp.eq.s32.totalorder %s25, 4
    %p132 = por %p130, %p131
    %p133 = scmp.ne.s32.totalorder %s124, %s125
    %p134 = scmp.eq.s32.totalorder %s25, 0
    %p135 = por %p133, %p134
    %p136 = scmp.ne.s32.totalorder %s124, %s125
    %p137 = scmp.eq.s32.totalorder %s26, 4
    %p138 = por %p136, %p137
    %p140 = scmp.ne.s32.totalorder %s125, %s139
    %p141 = scmp.eq.s32.totalorder %s26, 0
    %p142 = por %p140, %p141
    %s144 = sadd.s32 %s143, 1
    %p147 = scmp.eq.s32.totalorder %s20, 4
    %p148 = scmp.ne.s32.totalorder %s143, %s145
    %p149 = scmp.eq.s32.totalorder %s20, 0
    %p150 = por %p148, %p149
    %p151 = scmp.ne.s32.totalorder %s143, %s145
    %p152 = scmp.eq.s32.totalorder %s25, 4
    %p153 = por %p151, %p152
    %p154 = scmp.ne.s32.totalorder %s145, %s146
    %p155 = scmp.eq.s32.totalorder %s25, 0
    %p156 = por %p154, %p155
    %p157 = scmp.ne.s32.totalorder %s145, %s146
    %p158 = scmp.eq.s32.totalorder %s26, 4
    %p159 = por %p157, %p158
    %p161 = scmp.ne.s32.totalorder %s146, %s160
    %p162 = scmp.eq.s32.totalorder %s26, 0
    %p163 = por %p161, %p162
    %s165 = sadd.s32 %s164, 1
    %p168 = scmp.eq.s32.totalorder %s20, 4
    %p169 = scmp.ne.s32.totalorder %s164, %s166
    %p170 = scmp.eq.s32.totalorder %s20, 0
    %p171 = por %p169, %p170
    %p172 = scmp.ne.s32.totalorder %s164, %s166
    %p173 = scmp.eq.s32.totalorder %s25, 4
    %p174 = por %p172, %p173
    %p175 = scmp.ne.s32.totalorder %s166, %s167
    %p176 = scmp.eq.s32.totalorder %s25, 0
    %p177 = por %p175, %p176
    %p178 = scmp.ne.s32.totalorder %s166, %s167
    %p179 = scmp.eq.s32.totalorder %s26, 4
    %p180 = por %p178, %p179
    %p182 = scmp.ne.s32.totalorder %s167, %s181
    %p183 = scmp.eq.s32.totalorder %s26, 0
    %p184 = por %p182, %p183
    %s186 = sadd.s32 %s185, 1
    %p189 = scmp.eq.s32.totalorder %s20, 4
    %p190 = scmp.ne.s32.totalorder %s185, %s187
    %p191 = scmp.eq.s32.totalorder %s20, 0
    %p192 = por %p190, %p191
    %p193 = scmp.ne.s32.totalorder %s185, %s187
    %p194 = scmp.eq.s32.totalorder %s25, 4
    %p195 = por %p193, %p194
    %p196 = scmp.ne.s32.totalorder %s187, %s188
    %p197 = scmp.eq.s32.totalorder %s25, 0
    %p198 = por %p196, %p197
    %p199 = scmp.ne.s32.totalorder %s187, %s188
    %p200 = scmp.eq.s32.totalorder %s26, 4
    %p201 = por %p199, %p200
    %p203 = scmp.ne.s32.totalorder %s188, %s202
    %p204 = scmp.eq.s32.totalorder %s26, 0
    %p205 = por %p203, %p204
    %s207 = sadd.s32 %s206, 1
    %p210 = scmp.eq.s32.totalorder %s20, 4
    %p211 = scmp.ne.s32.totalorder %s206, %s208
    %p212 = scmp.eq.s32.totalorder %s20, 0
    %p213 = por %p211, %p212
    %p214 = scmp.ne.s32.totalorder %s206, %s208
    %p215 = scmp.eq.s32.totalorder %s25, 4
    %p216 = por %p214, %p215
    %p217 = scmp.ne.s32.totalorder %s208, %s209
    %p218 = scmp.eq.s32.totalorder %s25, 0
    %p219 = por %p217, %p218
    %p220 = scmp.ne.s32.totalorder %s208, %s209
    %p221 = scmp.eq.s32.totalorder %s26, 4
    %p222 = por %p220, %p221
    %p224 = scmp.ne.s32.totalorder %s209, %s223
    %p225 = scmp.eq.s32.totalorder %s26, 0
    %p226 = por %p224, %p225
    %s228 = sadd.s32 %s227, 1
    %p231 = scmp.eq.s32.totalorder %s20, 4
    %p232 = scmp.ne.s32.totalorder %s227, %s229
    %p233 = scmp.eq.s32.totalorder %s20, 0
    %p234 = por %p232, %p233
    %p235 = scmp.ne.s32.totalorder %s227, %s229
    %p236 = scmp.eq.s32.totalorder %s25, 4
    %p237 = por %p235, %p236
    %p238 = scmp.ne.s32.totalorder %s229, %s230
    %p239 = scmp.eq.s32.totalorder %s25, 0
    %p240 = por %p238, %p239
    %p241 = scmp.ne.s32.totalorder %s229, %s230
    %p242 = scmp.eq.s32.totalorder %s26, 4
    %p243 = por %p241, %p242
    %p245 = scmp.ne.s32.totalorder %s230, %s244
    %p246 = scmp.eq.s32.totalorder %s26, 0
    %p247 = por %p245, %p246
    %s249 = sadd.s32 %s248, 1
    %p252 = scmp.eq.s32.totalorder %s20, 4
    %p253 = scmp.ne.s32.totalorder %s248, %s250
    %p254 = scmp.eq.s32.totalorder %s20, 0
    %p255 = por %p253, %p254
    %p256 = scmp.ne.s32.totalorder %s248, %s250
    %p257 = scmp.eq.s32.totalorder %s25, 4
    %p258 = por %p256, %p257
    %p259 = scmp.ne.s32.totalorder %s250, %s251
    %p260 = scmp.eq.s32.totalorder %s25, 0
    %p261 = por %p259, %p260
    %p262 = scmp.ne.s32.totalorder %s250, %s251
    %p263 = scmp.eq.s32.totalorder %s26, 4
    %p264 = por %p262, %p263
    %p266 = scmp.ne.s32.totalorder %s251, %s265
    %p267 = scmp.eq.s32.totalorder %s26, 0
    %p268 = por %p266, %p267
    %s270 = sadd.s32 %s269, 1
    %p273 = scmp.eq.s32.totalorder %s20, 4
    %p274 = scmp.ne.s32.totalorder %s269, %s271
    %p275 = scmp.eq.s32.totalorder %s20, 0
    %p276 = por %p274, %p275
    %p277 = scmp.ne.s32.totalorder %s269, %s271
    %p278 = scmp.eq.s32.totalorder %s25, 4
    %p279 = por %p277, %p278
    %p280 = scmp.ne.s32.totalorder %s271, %s272
    %p281 = scmp.eq.s32.totalorder %s25, 0
    %p282 = por %p280, %p281
    %p283 = scmp.ne.s32.totalorder %s271, %s272
    %p284 = scmp.eq.s32.totalorder %s26, 4
    %p285 = por %p283, %p284
    %p287 = scmp.ne.s32.totalorder %s272, %s286
    %p288 = scmp.eq.s32.totalorder %s26, 0
    %p289 = por %p287, %p288
    %s291 = sadd.s32 %s290, 1
    %p294 = scmp.eq.s32.totalorder %s20, 4
    %p295 = scmp.ne.s32.totalorder %s290, %s292
    %p296 = scmp.eq.s32.totalorder %s20, 0
    %p297 = por %p295, %p296
    %p298 = scmp.ne.s32.totalorder %s290, %s292
    %p299 = scmp.eq.s32.totalorder %s25, 4
    %p300 = por %p298, %p299
    %p301 = scmp.ne.s32.totalorder %s292, %s293
    %p302 = scmp.eq.s32.totalorder %s25, 0
    %p303 = por %p301, %p302
    %p304 = scmp.ne.s32.totalorder %s292, %s293
    %p305 = scmp.eq.s32.totalorder %s26, 4
    %p306 = por %p304, %p305
    %p308 = scmp.ne.s32.totalorder %s293, %s307
    %p309 = scmp.eq.s32.totalorder %s26, 0
    %p310 = por %p308, %p309
    %s312 = sadd.s32 %s311, 1
    %p315 = scmp.eq.s32.totalorder %s20, 4
    %p316 = scmp.ne.s32.totalorder %s311, %s313
    %p317 = scmp.eq.s32.totalorder %s20, 0
    %p318 = por %p316, %p317
    %p319 = scmp.ne.s32.totalorder %s311, %s313
    %p320 = scmp.eq.s32.totalorder %s25, 4
    %p321 = por %p319, %p320
    %p322 = scmp.ne.s32.totalorder %s313, %s314
    %p323 = scmp.eq.s32.totalorder %s25, 0
    %p324 = por %p322, %p323
    %p325 = scmp.ne.s32.totalorder %s313, %s314
    %p326 = scmp.eq.s32.totalorder %s26, 4
    %p327 = por %p325, %p326
    %p329 = scmp.ne.s32.totalorder %s314, %s328
    %p330 = scmp.eq.s32.totalorder %s26, 0
    %p331 = por %p329, %p330
    %s332 = ssub.s32 %s20, %s27
    %p333 = scmp.eq.s32.totalorder %s332, 0
    %s335 = sadd.s32 %s334, 1
    %s336 = scalar_select %p333, %s334, %s335
    %p339 = pneg %p333
    %p340 = scmp.eq.s32.totalorder %s20, 4
    %p341 = por %p339, %p340
    %p342 = scmp.ne.s32.totalorder %s334, %s337
    %p343 = scmp.eq.s32.totalorder %s20, 0
    %p344 = por %p342, %p343
    %p345 = scmp.ne.s32.totalorder %s334, %s337
    %p346 = scmp.eq.s32.totalorder %s25, 4
    %p347 = por %p345, %p346
    %p348 = scmp.ne.s32.totalorder %s337, %s338
    %p349 = scmp.eq.s32.totalorder %s25, 0
    %p350 = por %p348, %p349
    %p351 = scmp.ne.s32.totalorder %s337, %s338
    %p352 = scmp.eq.s32.totalorder %s26, 4
    %p353 = por %p351, %p352
    %p355 = scmp.ne.s32.totalorder %s338, %s354
    %p356 = scmp.eq.s32.totalorder %s26, 0
    %p357 = por %p355, %p356
    %p358 = scmp.le.s32.totalorder 1, %s20
    %p359 = scmp.lt.s32.totalorder %s20, 6
    %p360 = pnand %p358, %p359
    %p361 = pneg %p360
    // Predicated region
    $region9: #{pirt_forward.3} parent=5 // pred_check
      _
    $region10: #{pirt_forward.3} parent=5 // pred_check_branch
      %363 = sbr.rel (%p360) target = $region12
    $region11: #{pirt_forward.3} parent=5 // pred_region
      %s364 = ssub.s32 %s20, 1
      // Predicated region
      $region13: #{pirt_forward.3} parent=11 // pred_check
        %p365 = pneg %p93
      $region14: #{pirt_forward.3} parent=11 // pred_check_branch
        %367 = sbr.rel (%p365) target = $region16
      $region15: #{pirt_forward.3} parent=11 // pred_region
        _
      $region16: #{pirt_forward.3} parent=11 // pred_fallthru
        _
      // Predicated region
      $region17: #{pirt_forward.3} parent=11 // pred_check
        %p368 = pneg %p114
      $region18: #{pirt_forward.3} parent=11 // pred_check_branch
        %370 = sbr.rel (%p368) target = $region20
      $region19: #{pirt_forward.3} parent=11 // pred_region
        _
      $region20: #{pirt_forward.3} parent=11 // pred_fallthru
        _
      // Predicated region
      $region21: #{pirt_forward.3} parent=11 // pred_check
        %p371 = pneg %p135
      $region22: #{pirt_forward.3} parent=11 // pred_check_branch
        %373 = sbr.rel (%p371) target = $region24
      $region23: #{pirt_forward.3} parent=11 // pred_region
        _
      $region24: #{pirt_forward.3} parent=11 // pred_fallthru
        _
      // Predicated region
      $region25: #{pirt_forward.3} parent=11 // pred_check
        %p374 = pneg %p156
      $region26: #{pirt_forward.3} parent=11 // pred_check_branch
        %376 = sbr.rel (%p374) target = $region28
      $region27: #{pirt_forward.3} parent=11 // pred_region
        _
      $region28: #{pirt_forward.3} parent=11 // pred_fallthru
        _
      // Predicated region
      $region29: #{pirt_forward.3} parent=11 // pred_check
        %p377 = pneg %p177
      $region30: #{pirt_forward.3} parent=11 // pred_check_branch
        %379 = sbr.rel (%p377) target = $region32
      $region31: #{pirt_forward.3} parent=11 // pred_region
        _
      $region32: #{pirt_forward.3} parent=11 // pred_fallthru
        _
      // Predicated region
      $region33: #{pirt_forward.3} parent=11 // pred_check
        %p380 = pneg %p198
      $region34: #{pirt_forward.3} parent=11 // pred_check_branch
        %382 = sbr.rel (%p380) target = $region36
      $region35: #{pirt_forward.3} parent=11 // pred_region
        _
      $region36: #{pirt_forward.3} parent=11 // pred_fallthru
        _
      // Predicated region
      $region37: #{pirt_forward.3} parent=11 // pred_check
        %p383 = pneg %p219
      $region38: #{pirt_forward.3} parent=11 // pred_check_branch
        %385 = sbr.rel (%p383) target = $region40
      $region39: #{pirt_forward.3} parent=11 // pred_region
        _
      $region40: #{pirt_forward.3} parent=11 // pred_fallthru
        _
      // Predicated region
      $region41: #{pirt_forward.3} parent=11 // pred_check
        %p386 = pneg %p240
      $region42: #{pirt_forward.3} parent=11 // pred_check_branch
        %388 = sbr.rel (%p386) target = $region44
      $region43: #{pirt_forward.3} parent=11 // pred_region
        _
      $region44: #{pirt_forward.3} parent=11 // pred_fallthru
        _
      // Predicated region
      $region45: #{pirt_forward.3} parent=11 // pred_check
        %p389 = pneg %p261
      $region46: #{pirt_forward.3} parent=11 // pred_check_branch
        %391 = sbr.rel (%p389) target = $region48
      $region47: #{pirt_forward.3} parent=11 // pred_region
        _
      $region48: #{pirt_forward.3} parent=11 // pred_fallthru
        _
      // Predicated region
      $region49: #{pirt_forward.3} parent=11 // pred_check
        %p392 = pneg %p282
      $region50: #{pirt_forward.3} parent=11 // pred_check_branch
        %394 = sbr.rel (%p392) target = $region52
      $region51: #{pirt_forward.3} parent=11 // pred_region
        _
      $region52: #{pirt_forward.3} parent=11 // pred_fallthru
        _
      // Predicated region
      $region53: #{pirt_forward.3} parent=11 // pred_check
        %p395 = pneg %p303
      $region54: #{pirt_forward.3} parent=11 // pred_check_branch
        %397 = sbr.rel (%p395) target = $region56
      $region55: #{pirt_forward.3} parent=11 // pred_region
        _
      $region56: #{pirt_forward.3} parent=11 // pred_fallthru
        _
      // Predicated region
      $region57: #{pirt_forward.3} parent=11 // pred_check
        %p398 = pneg %p324
      $region58: #{pirt_forward.3} parent=11 // pred_check_branch
        %400 = sbr.rel (%p398) target = $region60
      $region59: #{pirt_forward.3} parent=11 // pred_region
        _
      $region60: #{pirt_forward.3} parent=11 // pred_fallthru
        _
    $region12: #{pirt_forward.3} parent=5 // pred_fallthru
      _
    %p401 = scmp.lt.s32.totalorder %s20, 5
    // Predicated region
    $region61: #{pirt_forward.3} parent=5 // pred_check
      %p402 = pneg %p401
    $region62: #{pirt_forward.3} parent=5 // pred_check_branch
      %404 = sbr.rel (%p402) target = $region64
    $region63: #{pirt_forward.3} parent=5 // pred_region
      // Predicated region
      $region65: #{pirt_forward.3} parent=63 // pred_check
        %p405 = pneg %p40
      $region66: #{pirt_forward.3} parent=63 // pred_check_branch
        %407 = sbr.rel (%p405) target = $region68
      $region67: #{pirt_forward.3} parent=63 // pred_region
        %s408 = smul.u32 3, %s20
        %p409 = scmp.lt.s32.totalorder %s408, 14
        %s410 = scalar_select %p409, %s408, 14
        %s411 = smul.addr %s410, 8
        %s412 = scalar_lea.vmem %s0, %s411
        %s413 = smul.u32 3, %s20
      $region68: #{pirt_forward.3} parent=63 // pred_fallthru
        _
      // Predicated region
      $region69: #{pirt_forward.3} parent=63 // pred_check
        %p414 = pneg %p66
      $region70: #{pirt_forward.3} parent=63 // pred_check_branch
        %416 = sbr.rel (%p414) target = $region72
      $region71: #{pirt_forward.3} parent=63 // pred_region
        %s417 = smul.u32 3, %s20
        %p418 = scmp.lt.s32.totalorder %s417, 14
        %s419 = scalar_select %p418, %s417, 14
        %s420 = smul.addr %s419, 8
        %s421 = scalar_lea.vmem %s1, %s420
        %s422 = smul.u32 3, %s20
      $region72: #{pirt_forward.3} parent=63 // pred_fallthru
        _
    $region64: #{pirt_forward.3} parent=5 // pred_fallthru
      _
    %p423 = scmp.le.s32.totalorder 1, %s20
    %p424 = scmp.lt.s32.totalorder %s20, 6
    %p425 = pnand %p423, %p424
    %p426 = pneg %p425
    // Predicated region
    $region73: #{pirt_forward.3} parent=5 // pred_check
      _
    $region74: #{pirt_forward.3} parent=5 // pred_check_branch
      %428 = sbr.rel (%p425) target = $region76
    $region75: #{pirt_forward.3} parent=5 // pred_region
      %s429 = ssub.s32 %s20, 1
      %s430 = smul.u32 3, %s25
      %p431 = scmp.lt.s32.totalorder %s430, 14
      %s432 = scalar_select %p431, %s430, 14
      %s433 = smul.addr %s432, 8
      %s434 = scalar_lea.vmem %s0, %s433
      %p435 = pneg %p46
      %p436 = pneg %p43
      %s437 = smul.u32 3, %s25
      %p438 = scmp.lt.s32.totalorder %s437, 14
      %s439 = scalar_select %p438, %s437, 14
      %s440 = smul.addr %s439, 8
      %s441 = scalar_lea.vmem %s1, %s440
      %p442 = pneg %p72
      %p443 = pneg %p69
      %p444 = pneg %p93
      %p445 = pneg %p90
      %p446 = pneg %p114
      %p447 = pneg %p111
      %p448 = pneg %p135
      %p449 = pneg %p132
      %p450 = pneg %p156
      %p451 = pneg %p153
      %p452 = pneg %p177
      %p453 = pneg %p174
      %p454 = pneg %p198
      %p455 = pneg %p195
      %p456 = pneg %p219
      %p457 = pneg %p216
      %p458 = pneg %p240
      %p459 = pneg %p237
      %p460 = pneg %p261
      %p461 = pneg %p258
      %p462 = pneg %p282
      %p463 = pneg %p279
      %p464 = pneg %p303
      %p465 = pneg %p300
      %p466 = pneg %p324
      %p467 = pneg %p321
      %p468 = pneg %p350
      %p469 = pneg %p347
      %s470 = smul.u32 3, %s25
      %p471 = scmp.lt.s32.totalorder %s470, 14
      %s472 = scalar_select %p471, %s470, 14
      %s473 = smul.addr %s472, 8
      %s474 = scalar_lea.vmem %s14, %s473
      %s475 = smul.u32 3, %s25
      %p476 = scmp.lt.s32.totalorder %s475, 14
      %s477 = scalar_select %p476, %s475, 14
      %s478 = smul.addr %s477, 8
      %s479 = scalar_lea.vmem %s0, %s478
      %s480 = smul.u32 3, %s25
      %s481 = smul.u32 3, %s25
      %p482 = scmp.lt.s32.totalorder %s481, 14
      %s483 = scalar_select %p482, %s481, 14
      %s484 = smul.addr %s483, 8
      %s485 = scalar_lea.vmem %s1, %s484
      %s486 = smul.u32 3, %s25
      %s487 = smul.u32 3, %s25
      %p488 = scmp.lt.s32.totalorder %s487, 14
      %s489 = scalar_select %p488, %s487, 14
      %s490 = smul.addr %s489, 8
      %s491 = scalar_lea.vmem %s14, %s490
      %s492 = smul.u32 3, %s25
      %v494 = vld [vmem:[%s479] sm:$0xff]
      %v495 = vld [vmem:[%s479 + $0x8] sm:$0xff]
      %v496 = vld [vmem:[%s479 + $0x10] sm:$0xff]
      %v497 = vld [vmem:[%s485] sm:$0xff]
      %v498 = vld [vmem:[%s485 + $0x8] sm:$0xff]
      %v499 = vld [vmem:[%s485 + $0x10] sm:$0xff]
      %v500 = vpack.c.bf16 %v495, %v494
      %v501 = vpack.c.bf16 %v496, %v496
      %v502 = vld [vmem:[%s2] sm:$0xf]
      %v503 = vld [vmem:[%s2 + $0x4] sm:$0xf]
      %v504 = vld [vmem:[%s2 + $0x8] sm:$0xf]
      %v505 = vld [vmem:[%s2 + $0xc] sm:$0xf]
      %v506 = vld [vmem:[%s3] sm:$0x1]
      %v508 = vlaneseq
      %v509 = vshrl.u32 %v508, 7
      %v510 = vsub.s32 0, %v509
      %v511 = vrot.slane %v506, %v510
      %v517 = vunpack.c.l.b16 %v502
      %v518 = vunpack.c.l.b16 %v503
      %v519 = vunpack.c.l.b16 %v504
      %v520 = vunpack.c.l.b16 %v505
      %v521 = vpack.c.b16 %v518, %v517
      %v522 = vpack.c.b16 %v520, %v519
      %vm525 = vcmask 261120
      %v527 = vsel %vm525, %v500, 0
      %v530 = vsel %vm525, %v501, 0
      %532 = vmatprep.subr.bf16.mxu0 0
      %533 = vmatpush1.bf16.msra.mxu0 %v521
      %534 = vmatprep.subr.bf16.mxu0 0
      %535 = vmatpush1.bf16.msra.mxu0 %v522
      %536 = vmatprep.subr.bf16.mxu0 0
      %537 = vmatpush1.bf16.msra.mxu0 0
      %538 = vmatprep.subr.bf16.mxu0 0
      %539 = vmatpush1.bf16.msra.mxu0 0
      %540 = vmatprep.subr.bf16.mxu0 0
      %541 = vmatpush1.bf16.msra.mxu0 0
      %542 = vmatprep.subr.bf16.mxu0 0
      %543 = vmatpush1.bf16.msra.mxu0 0
      %544 = vmatprep.subr.bf16.mxu0 0
      %545 = vmatpush1.bf16.msra.mxu0 0
      %546 = vmatprep.subr.bf16.mxu0 0
      %547 = vmatpush1.bf16.msra.mxu0 0
      %548 = vmatprep.subr.bf16.mxu0 0
      %549 = vmatpush1.bf16.msra.mxu0 0
      %550 = vmatprep.subr.bf16.mxu0 0
      %551 = vmatpush1.bf16.msra.mxu0 0
      %552 = vmatprep.subr.bf16.mxu0 0
      %553 = vmatpush1.bf16.msra.mxu0 0
      %554 = vmatprep.subr.bf16.mxu0 0
      %555 = vmatpush1.bf16.msra.mxu0 0
      %556 = vmatprep.subr.bf16.mxu0 0
      %557 = vmatpush1.bf16.msra.mxu0 0
      %558 = vmatprep.subr.bf16.mxu0 0
      %559 = vmatpush1.bf16.msra.mxu0 0
      %560 = vmatprep.subr.bf16.mxu0 0
      %561 = vmatpush1.bf16.msra.mxu0 0
      %562 = vmatprep.subr.bf16.mxu0 0
      %563 = vmatpush1.bf16.msra.mxu0 0
      %564 = vmatprep.mubr.bf16.mxu0 0
      %565 = vmatmul.mubr.bf16.gmra.mrb[0].mxu0 %v527
      %v566 = vpop.f32.mrb[0].mxu0
      %v567 = vadd.f32 %v511, %v566
      %v568 = vpop.f32.mrb[0].mxu0
      %v569 = vpop.f32.mrb[0].mxu0
      %v570 = vadd.f32 %v511, %v569
      %v571 = vpop.f32.mrb[0].mxu0
      %572 = vmatprep.mubr.bf16.mxu0 0
      %573 = vmatmul.mubr.bf16.gmra.mrb[0].mxu0 %v530
      %v574 = vpop.f32.mrb[0].mxu0
      %v575 = vadd.f32 %v511, %v574
      %v576 = vpop.f32.mrb[0].mxu0
      %v577 = vpop.f32.mrb[0].mxu0
      %v578 = vpop.f32.mrb[0].mxu0
      %579 = vdwg.mxu0
      %v580 = vpack.c.bf16 %v570, %v567
      %v581 = vpack.c.bf16 %v575, %v575
      %584 = vrot.lane.b32.xlu0 %v580, 96
      %v585 = vpop.permute.xlu0 %584
      %586 = vrot.lane.b32.xlu0 %v581, 96
      %v587 = vpop.permute.xlu0 %586
      %vm588 = vcmask 64512
      %v590 = vsel %vm588, %v580, 0
      %v593 = vsel %vm588, %v581, 0
      %v596 = vsel %vm588, %v585, 0
      %v599 = vsel %vm588, %v587, 0
      %601 = vmatprep.subr.bf16.mxu0 0
      %602 = vmatpush1.bf16.xpose.msra.mxu0 %v596
      %603 = vmatprep.subr.bf16.mxu0 0
      %604 = vmatpush1.bf16.xpose.msra.mxu0 %v599
      %605 = vmatprep.subr.bf16.mxu0 0
      %606 = vmatpush1.bf16.xpose.msra.mxu0 0
      %607 = vmatprep.subr.bf16.mxu0 0
      %608 = vmatpush1.bf16.xpose.msra.mxu0 0
      %609 = vmatprep.subr.bf16.mxu0 0
      %610 = vmatpush1.bf16.xpose.msra.mxu0 0
      %611 = vmatprep.subr.bf16.mxu0 0
      %612 = vmatpush1.bf16.xpose.msra.mxu0 0
      %613 = vmatprep.subr.bf16.mxu0 0
      %614 = vmatpush1.bf16.xpose.msra.mxu0 0
      %615 = vmatprep.subr.bf16.mxu0 0
      %616 = vmatpush1.bf16.xpose.msra.mxu0 0
      %617 = vmatprep.subr.bf16.mxu0 0
      %618 = vmatpush1.bf16.xpose.msra.mxu0 0
      %619 = vmatprep.subr.bf16.mxu0 0
      %620 = vmatpush1.bf16.xpose.msra.mxu0 0
      %621 = vmatprep.subr.bf16.mxu0 0
      %622 = vmatpush1.bf16.xpose.msra.mxu0 0
      %623 = vmatprep.subr.bf16.mxu0 0
      %624 = vmatpush1.bf16.xpose.msra.mxu0 0
      %625 = vmatprep.subr.bf16.mxu0 0
      %626 = vmatpush1.bf16.xpose.msra.mxu0 0
      %627 = vmatprep.subr.bf16.mxu0 0
      %628 = vmatpush1.bf16.xpose.msra.mxu0 0
      %629 = vmatprep.subr.bf16.mxu0 0
      %630 = vmatpush1.bf16.xpose.msra.mxu0 0
      %631 = vmatprep.subr.bf16.mxu0 0
      %632 = vmatpush1.bf16.xpose.msra.mxu0 0
      %633 = vmatprep.mubr.bf16.mxu0 0
      %634 = vmatmul.mubr.bf16.gmra.mrb[0].mxu0 %v590
      %v635 = vpop.f32.mrb[0].mxu0
      %v636 = vadd.f32 %v497, %v635
      %v637 = vpop.f32.mrb[0].mxu0
      %v638 = vpop.f32.mrb[0].mxu0
      %v639 = vadd.f32 %v498, %v638
      %v640 = vpop.f32.mrb[0].mxu0
      %641 = vmatprep.mubr.bf16.mxu0 0
      %642 = vmatmul.mubr.bf16.gmra.mrb[0].mxu0 %v593
      %v643 = vpop.f32.mrb[0].mxu0
      %v644 = vadd.f32 %v499, %v643
      %v645 = vpop.f32.mrb[0].mxu0
      %v646 = vpop.f32.mrb[0].mxu0
      %v647 = vpop.f32.mrb[0].mxu0
      %648 = vdwg.mxu0
      %vm649 = vcmask 195584
      %v650 = vsel %vm649, %v636, -inf
      %651 = vmax.xlane.f32.xlu0 %v650
      %v652 = vpop.xlane.xlu0 %651
      %v653 = vsel %vm649, %v639, -inf
      %654 = vmax.xlane.f32.xlu0 %v653
      %v655 = vpop.xlane.xlu0 %654
      %v656 = vsel %vm649, %v644, -inf
      %657 = vmax.xlane.f32.xlu0 %v656
      %v658 = vpop.xlane.xlu0 %657
      %v659 = vsub.f32 %v636, %v652
      %v660 = vsub.f32 %v639, %v655
      %v661 = vsub.f32 %v644, %v658
      %v662 = vmul.f32 %v659, 1.442695
      %v663 = vpow.pop %v662
      %v664 = vmul.f32 %v660, 1.442695
      %v665 = vpow.pop %v664
      %v666 = vmul.f32 %v661, 1.442695
      %v667 = vpow.pop %v666
      %v668 = vsel %vm649, %v663, 0.0
      %669 = vadd.xlane.f32.xlu0 %v668
      %v670 = vpop.xlane.xlu0 %669
      %v671 = vsel %vm649, %v665, 0.0
      %672 = vadd.xlane.f32.xlu0 %v671
      %v673 = vpop.xlane.xlu0 %672
      %v674 = vsel %vm649, %v667, 0.0
      %675 = vadd.xlane.f32.xlu0 %v674
      %v676 = vpop.xlane.xlu0 %675
      %v677 = vrcp.pop %v670
      %v678 = vrcp.pop %v673
      %v679 = vrcp.pop %v676
      %v680 = vmul.f32 %v663, %v677
      %v681 = vmul.f32 %v665, %v678
      %v682 = vmul.f32 %v667, %v679
      %v683 = vpack.c.bf16 %v681, %v680
      %v684 = vpack.c.bf16 %v682, %v682
      %685 = vrot.lane.b32.xlu0 %v580, 64
      %v686 = vpop.permute.xlu0 %685
      %687 = vrot.lane.b32.xlu0 %v581, 64
      %v688 = vpop.permute.xlu0 %687
      %v691 = vsel %vm649, %v683, 0
      %v694 = vsel %vm649, %v684, 0
      %vm696 = vcmask 1043456
      %v698 = vsel %vm696, %v688, 0
      %700 = vmatprep.subr.bf16.mxu0 0
      %701 = vmatpush1.bf16.msra.mxu0 %v686
      %702 = vmatprep.subr.bf16.mxu0 0
      %703 = vmatpush1.bf16.msra.mxu0 %v698
      %704 = vmatprep.subr.bf16.mxu0 0
      %705 = vmatpush1.bf16.msra.mxu0 0
      %706 = vmatprep.subr.bf16.mxu0 0
      %707 = vmatpush1.bf16.msra.mxu0 0
      %708 = vmatprep.subr.bf16.mxu0 0
      %709 = vmatpush1.bf16.msra.mxu0 0
      %710 = vmatprep.subr.bf16.mxu0 0
      %711 = vmatpush1.bf16.msra.mxu0 0
      %712 = vmatprep.subr.bf16.mxu0 0
      %713 = vmatpush1.bf16.msra.mxu0 0
      %714 = vmatprep.subr.bf16.mxu0 0
      %715 = vmatpush1.bf16.msra.mxu0 0
      %716 = vmatprep.subr.bf16.mxu0 0
      %717 = vmatpush1.bf16.msra.mxu0 0
      %718 = vmatprep.subr.bf16.mxu0 0
      %719 = vmatpush1.bf16.msra.mxu0 0
      %720 = vmatprep.subr.bf16.mxu0 0
      %721 = vmatpush1.bf16.msra.mxu0 0
      %722 = vmatprep.subr.bf16.mxu0 0
      %723 = vmatpush1.bf16.msra.mxu0 0
      %724 = vmatprep.subr.bf16.mxu0 0
      %725 = vmatpush1.bf16.msra.mxu0 0
      %726 = vmatprep.subr.bf16.mxu0 0
      %727 = vmatpush1.bf16.msra.mxu0 0
      %728 = vmatprep.subr.bf16.mxu0 0
      %729 = vmatpush1.bf16.msra.mxu0 0
      %730 = vmatprep.subr.bf16.mxu0 0
      %731 = vmatpush1.bf16.msra.mxu0 0
      %732 = vmatprep.mubr.bf16.mxu0 0
      %733 = vmatmul.mubr.bf16.gmra.mrb[0].mxu0 %v691
      %v734 = vpop.f32.mrb[0].mxu0
      %v735 = vadd.f32 0.0, %v734
      %v736 = vpop.f32.mrb[0].mxu0
      %v737 = vpop.f32.mrb[0].mxu0
      %v738 = vadd.f32 0.0, %v737
      %v739 = vpop.f32.mrb[0].mxu0
      %740 = vmatprep.mubr.bf16.mxu0 0
      %741 = vmatmul.mubr.bf16.gmra.mrb[0].mxu0 %v694
      %v742 = vpop.f32.mrb[0].mxu0
      %v743 = vadd.f32 0.0, %v742
      %v744 = vpop.f32.mrb[0].mxu0
      %v745 = vpop.f32.mrb[0].mxu0
      %v746 = vpop.f32.mrb[0].mxu0
      %747 = vdwg.mxu0
      %v748 = vpack.c.bf16 %v738, %v735
      %v749 = vpack.c.bf16 %v743, %v743
      %v750 = vld [vmem:[%s4] sm:$0xf]
      %751 = vrot.lane.b32.xlu0 %v580, 120
      %v752 = vpop.permute.xlu0 %751
      %753 = vrot.lane.b32.xlu0 %v581, 120
      %v754 = vpop.permute.xlu0 %753
      %755 = vrot.lane.b32.xlu0 %v580, 88
      %v756 = vpop.permute.xlu0 %755
      %757 = vrot.lane.b32.xlu0 %v581, 88
      %v758 = vpop.permute.xlu0 %757
      %v760 = vsel %vm588, %v752, 0
      %v763 = vsel %vm588, %v754, 0
      %v766 = vsel %vm588, %v756, 0
      %v769 = vsel %vm588, %v758, 0
      %771 = vmatprep.subr.bf16.mxu0 0
      %772 = vmatpush1.bf16.xpose.msra.mxu0 %v766
      %773 = vmatprep.subr.bf16.mxu0 0
      %774 = vmatpush1.bf16.xpose.msra.mxu0 %v769
      %775 = vmatprep.subr.bf16.mxu0 0
      %776 = vmatpush1.bf16.xpose.msra.mxu0 0
      %777 = vmatprep.subr.bf16.mxu0 0
      %778 = vmatpush1.bf16.xpose.msra.mxu0 0
      %779 = vmatprep.subr.bf16.mxu0 0
      %780 = vmatpush1.bf16.xpose.msra.mxu0 0
      %781 = vmatprep.subr.bf16.mxu0 0
      %782 = vmatpush1.bf16.xpose.msra.mxu0 0
      %783 = vmatprep.subr.bf16.mxu0 0
      %784 = vmatpush1.bf16.xpose.msra.mxu0 0
      %785 = vmatprep.subr.bf16.mxu0 0
      %786 = vmatpush1.bf16.xpose.msra.mxu0 0
      %787 = vmatprep.subr.bf16.mxu0 0
      %788 = vmatpush1.bf16.xpose.msra.mxu0 0
      %789 = vmatprep.subr.bf16.mxu0 0
      %790 = vmatpush1.bf16.xpose.msra.mxu0 0
      %791 = vmatprep.subr.bf16.mxu0 0
      %792 = vmatpush1.bf16.xpose.msra.mxu0 0
      %793 = vmatprep.subr.bf16.mxu0 0
      %794 = vmatpush1.bf16.xpose.msra.mxu0 0
      %795 = vmatprep.subr.bf16.mxu0 0
      %796 = vmatpush1.bf16.xpose.msra.mxu0 0
      %797 = vmatprep.subr.bf16.mxu0 0
      %798 = vmatpush1.bf16.xpose.msra.mxu0 0
      %799 = vmatprep.subr.bf16.mxu0 0
      %800 = vmatpush1.bf16.xpose.msra.mxu0 0
      %801 = vmatprep.subr.bf16.mxu0 0
      %802 = vmatpush1.bf16.xpose.msra.mxu0 0
      %803 = vmatprep.mubr.bf16.mxu0 0
      %804 = vmatmul.mubr.bf16.gmra.mrb[0].mxu0 %v760
      %v805 = vpop.f32.mrb[0].mxu0
      %v806 = vadd.f32 %v497, %v805
      %v807 = vpop.f32.mrb[0].mxu0
      %v808 = vpop.f32.mrb[0].mxu0
      %v809 = vadd.f32 %v498, %v808
      %v810 = vpop.f32.mrb[0].mxu0
      %811 = vmatprep.mubr.bf16.mxu0 0
      %812 = vmatmul.mubr.bf16.gmra.mrb[0].mxu0 %v763
      %v813 = vpop.f32.mrb[0].mxu0
      %v814 = vadd.f32 %v499, %v813
      %v815 = vpop.f32.mrb[0].mxu0
      %v816 = vpop.f32.mrb[0].mxu0
      %v817 = vpop.f32.mrb[0].mxu0
      %818 = vdwg.mxu0
      %v819 = vsel %vm649, %v806, -inf
      %820 = vmax.xlane.f32.xlu0 %v819
      %v821 = vpop.xlane.xlu0 %820
      %v822 = vsel %vm649, %v809, -inf
      %823 = vmax.xlane.f32.xlu0 %v822
      %v824 = vpop.xlane.xlu0 %823
      %v825 = vsel %vm649, %v814, -inf
      %826 = vmax.xlane.f32.xlu0 %v825
      %v827 = vpop.xlane.xlu0 %826
      %v828 = vsub.f32 %v806, %v821
      %v829 = vsub.f32 %v809, %v824
      %v830 = vsub.f32 %v814, %v827
      %v831 = vmul.f32 %v828, 1.442695
      %v832 = vpow.pop %v831
      %v833 = vmul.f32 %v829, 1.442695
      %v834 = vpow.pop %v833
      %v835 = vmul.f32 %v830, 1.442695
      %v836 = vpow.pop %v835
      %v837 = vsel %vm649, %v832, 0.0
      %838 = vadd.xlane.f32.xlu0 %v837
      %v839 = vpop.xlane.xlu0 %838
      %v840 = vsel %vm649, %v834, 0.0
      %841 = vadd.xlane.f32.xlu0 %v840
      %v842 = vpop.xlane.xlu0 %841
      %v843 = vsel %vm649, %v836, 0.0
      %844 = vadd.xlane.f32.xlu0 %v843
      %v845 = vpop.xlane.xlu0 %844
      %v846 = vrcp.pop %v839
      %v847 = vrcp.pop %v842
      %v848 = vrcp.pop %v845
      %v849 = vmul.f32 %v832, %v846
      %v850 = vmul.f32 %v834, %v847
      %v851 = vmul.f32 %v836, %v848
      %v852 = vpack.c.bf16 %v850, %v849
      %v853 = vpack.c.bf16 %v851, %v851
      %854 = vrot.lane.b32.xlu0 %v580, 56
      %v855 = vpop.permute.xlu0 %854
      %856 = vrot.lane.b32.xlu0 %v581, 56
      %v857 = vpop.permute.xlu0 %856
      %v860 = vsel %vm649, %v852, 0
      %v863 = vsel %vm649, %v853, 0
      %v866 = vsel %vm696, %v857, 0
      %868 = vmatprep.subr.bf16.mxu0 0
      %869 = vmatpush1.bf16.msra.mxu0 %v855
      %870 = vmatprep.subr.bf16.mxu0 0
      %871 = vmatpush1.bf16.msra.mxu0 %v866
      %872 = vmatprep.subr.bf16.mxu0 0
      %873 = vmatpush1.bf16.msra.mxu0 0
      %874 = vmatprep.subr.bf16.mxu0 0
      %875 = vmatpush1.bf16.msra.mxu0 0
      %876 = vmatprep.subr.bf16.mxu0 0
      %877 = vmatpush1.bf16.msra.mxu0 0
      %878 = vmatprep.subr.bf16.mxu0 0
      %879 = vmatpush1.bf16.msra.mxu0 0
      %880 = vmatprep.subr.bf16.mxu0 0
      %881 = vmatpush1.bf16.msra.mxu0 0
      %882 = vmatprep.subr.bf16.mxu0 0
      %883 = vmatpush1.bf16.msra.mxu0 0
      %884 = vmatprep.subr.bf16.mxu0 0
      %885 = vmatpush1.bf16.msra.mxu0 0
      %886 = vmatprep.subr.bf16.mxu0 0
      %887 = vmatpush1.bf16.msra.mxu0 0
      %888 = vmatprep.subr.bf16.mxu0 0
      %889 = vmatpush1.bf16.msra.mxu0 0
      %890 = vmatprep.subr.bf16.mxu0 0
      %891 = vmatpush1.bf16.msra.mxu0 0
      %892 = vmatprep.subr.bf16.mxu0 0
      %893 = vmatpush1.bf16.msra.mxu0 0
      %894 = vmatprep.subr.bf16.mxu0 0
      %895 = vmatpush1.bf16.msra.mxu0 0
      %896 = vmatprep.subr.bf16.mxu0 0
      %897 = vmatpush1.bf16.msra.mxu0 0
      %898 = vmatprep.subr.bf16.mxu0 0
      %899 = vmatpush1.bf16.msra.mxu0 0
      %900 = vmatprep.mubr.bf16.mxu0 0
      %901 = vmatmul.mubr.bf16.gmra.mrb[0].mxu0 %v860
      %v902 = vpop.f32.mrb[0].mxu0
      %v903 = vadd.f32 0.0, %v902
      %v904 = vpop.f32.mrb[0].mxu0
      %v905 = vpop.f32.mrb[0].mxu0
      %v906 = vadd.f32 0.0, %v905
      %v907 = vpop.f32.mrb[0].mxu0
      %908 = vmatprep.mubr.bf16.mxu0 0
      %909 = vmatmul.mubr.bf16.gmra.mrb[0].mxu0 %v863
      %v910 = vpop.f32.mrb[0].mxu0
      %v911 = vadd.f32 0.0, %v910
      %v912 = vpop.f32.mrb[0].mxu0
      %v913 = vpop.f32.mrb[0].mxu0
      %v914 = vpop.f32.mrb[0].mxu0
      %915 = vdwg.mxu0
      %v916 = vpack.c.bf16 %v906, %v903
      %v917 = vpack.c.bf16 %v911, %v911
      %v918 = vld [vmem:[%s4 + $0x4] sm:$0xf]
      %v920 = vsel %vm588, %v916, 0
      %v923 = vsel %vm588, %v917, 0
      %v926 = vsel %vm696, %v918, 0
      %928 = vmatprep.subr.bf16.mxu0 0
      %929 = vmatpush1.bf16.msra.mxu0 %v926
      %930 = vmatprep.subr.bf16.mxu0 0
      %931 = vmatpush1.bf16.msra.mxu0 0
      %932 = vmatprep.subr.bf16.mxu0 0
      %933 = vmatpush1.bf16.msra.mxu0 0
      %934 = vmatprep.subr.bf16.mxu0 0
      %935 = vmatpush1.bf16.msra.mxu0 0
      %936 = vmatprep.subr.bf16.mxu0 0
      %937 = vmatpush1.bf16.msra.mxu0 0
      %938 = vmatprep.subr.bf16.mxu0 0
      %939 = vmatpush1.bf16.msra.mxu0 0
      %940 = vmatprep.subr.bf16.mxu0 0
      %941 = vmatpush1.bf16.msra.mxu0 0
      %942 = vmatprep.subr.bf16.mxu0 0
      %943 = vmatpush1.bf16.msra.mxu0 0
      %944 = vmatprep.subr.bf16.mxu0 0
      %945 = vmatpush1.bf16.msra.mxu0 0
      %946 = vmatprep.subr.bf16.mxu0 0
      %947 = vmatpush1.bf16.msra.mxu0 0
      %948 = vmatprep.subr.bf16.mxu0 0
      %949 = vmatpush1.bf16.msra.mxu0 0
      %950 = vmatprep.subr.bf16.mxu0 0
      %951 = vmatpush1.bf16.msra.mxu0 0
      %952 = vmatprep.subr.bf16.mxu0 0
      %953 = vmatpush1.bf16.msra.mxu0 0
      %954 = vmatprep.subr.bf16.mxu0 0
      %955 = vmatpush1.bf16.msra.mxu0 0
      %956 = vmatprep.subr.bf16.mxu0 0
      %957 = vmatpush1.bf16.msra.mxu0 0
      %958 = vmatprep.subr.bf16.mxu0 0
      %959 = vmatpush1.bf16.msra.mxu0 0
      %960 = vmatprep.mubr.bf16.mxu0 0
      %961 = vmatmul.mubr.bf16.gmra.mrb[0].mxu0 %v920
      %v962 = vpop.f32.mrb[0].mxu0
      %v963 = vadd.f32 0.0, %v962
      %v964 = vpop.f32.mrb[0].mxu0
      %v965 = vpop.f32.mrb[0].mxu0
      %v966 = vadd.f32 0.0, %v965
      %v967 = vpop.f32.mrb[0].mxu0
      %968 = vmatprep.mubr.bf16.mxu0 0
      %969 = vmatmul.mubr.bf16.gmra.mrb[0].mxu0 %v923
      %v970 = vpop.f32.mrb[0].mxu0
      %v971 = vadd.f32 0.0, %v970
      %v972 = vpop.f32.mrb[0].mxu0
      %v973 = vpop.f32.mrb[0].mxu0
      %v974 = vpop.f32.mrb[0].mxu0
      %975 = vdwg.mxu0
      %v977 = vsel %vm588, %v748, 0
      %v980 = vsel %vm588, %v749, 0
      %v983 = vsel %vm696, %v750, 0
      %985 = vmatprep.subr.bf16.mxu0 0
      %986 = vmatpush1.bf16.msra.mxu0 %v983
      %987 = vmatprep.subr.bf16.mxu0 0
      %988 = vmatpush1.bf16.msra.mxu0 0
      %989 = vmatprep.subr.bf16.mxu0 0
      %990 = vmatpush1.bf16.msra.mxu0 0
      %991 = vmatprep.subr.bf16.mxu0 0
      %992 = vmatpush1.bf16.msra.mxu0 0
      %993 = vmatprep.subr.bf16.mxu0 0
      %994 = vmatpush1.bf16.msra.mxu0 0
      %995 = vmatprep.subr.bf16.mxu0 0
      %996 = vmatpush1.bf16.msra.mxu0 0
      %997 = vmatprep.subr.bf16.mxu0 0
      %998 = vmatpush1.bf16.msra.mxu0 0
      %999 = vmatprep.subr.bf16.mxu0 0
      %1000 = vmatpush1.bf16.msra.mxu0 0
      %1001 = vmatprep.subr.bf16.mxu0 0
      %1002 = vmatpush1.bf16.msra.mxu0 0
      %1003 = vmatprep.subr.bf16.mxu0 0
      %1004 = vmatpush1.bf16.msra.mxu0 0
      %1005 = vmatprep.subr.bf16.mxu0 0
      %1006 = vmatpush1.bf16.msra.mxu0 0
      %1007 = vmatprep.subr.bf16.mxu0 0
      %1008 = vmatpush1.bf16.msra.mxu0 0
      %1009 = vmatprep.subr.bf16.mxu0 0
      %1010 = vmatpush1.bf16.msra.mxu0 0
      %1011 = vmatprep.subr.bf16.mxu0 0
      %1012 = vmatpush1.bf16.msra.mxu0 0
      %1013 = vmatprep.subr.bf16.mxu0 0
      %1014 = vmatpush1.bf16.msra.mxu0 0
      %1015 = vmatprep.subr.bf16.mxu0 0
      %1016 = vmatpush1.bf16.msra.mxu0 0
      %1017 = vmatprep.mubr.bf16.mxu0 0
      %1018 = vmatmul.mubr.bf16.gmra.mrb[0].mxu0 %v977
      %v1019 = vpop.f32.mrb[0].mxu0
      %v1020 = vadd.f32 %v963, %v1019
      %v1021 = vpop.f32.mrb[0].mxu0
      %v1022 = vpop.f32.mrb[0].mxu0
      %v1023 = vadd.f32 %v966, %v1022
      %v1024 = vpop.f32.mrb[0].mxu0
      %1025 = vmatprep.mubr.bf16.mxu0 0
      %1026 = vmatmul.mubr.bf16.gmra.mrb[0].mxu0 %v980
      %v1027 = vpop.f32.mrb[0].mxu0
      %v1028 = vadd.f32 %v971, %v1027
      %v1029 = vpop.f32.mrb[0].mxu0
      %v1030 = vpop.f32.mrb[0].mxu0
      %v1031 = vpop.f32.mrb[0].mxu0
      %1032 = vdwg.mxu0
      %1033 = vrot.lane.b32.xlu0 %v580, 112
      %v1034 = vpop.permute.xlu0 %1033
      %1035 = vrot.lane.b32.xlu0 %v581, 112
      %v1036 = vpop.permute.xlu0 %1035
      %1037 = vrot.lane.b32.xlu0 %v580, 80
      %v1038 = vpop.permute.xlu0 %1037
      %1039 = vrot.lane.b32.xlu0 %v581, 80
      %v1040 = vpop.permute.xlu0 %1039
      %v1042 = vsel %vm588, %v1034, 0
      %v1045 = vsel %vm588, %v1036, 0
      %v1048 = vsel %vm588, %v1038, 0
      %v1051 = vsel %vm588, %v1040, 0
      %1053 = vmatprep.subr.bf16.mxu0 0
      %1054 = vmatpush1.bf16.xpose.msra.mxu0 %v1048
      %1055 = vmatprep.subr.bf16.mxu0 0
      %1056 = vmatpush1.bf16.xpose.msra.mxu0 %v1051
      %1057 = vmatprep.subr.bf16.mxu0 0
      %1058 = vmatpush1.bf16.xpose.msra.mxu0 0
      %1059 = vmatprep.subr.bf16.mxu0 0
      %1060 = vmatpush1.bf16.xpose.msra.mxu0 0
      %1061 = vmatprep.subr.bf16.mxu0 0
      %1062 = vmatpush1.bf16.xpose.msra.mxu0 0
      %1063 = vmatprep.subr.bf16.mxu0 0
      %1064 = vmatpush1.bf16.xpose.msra.mxu0 0
      %1065 = vmatprep.subr.bf16.mxu0 0
      %1066 = vmatpush1.bf16.xpose.msra.mxu0 0
      %1067 = vmatprep.subr.bf16.mxu0 0
      %1068 = vmatpush1.bf16.xpose.msra.mxu0 0
      %1069 = vmatprep.subr.bf16.mxu0 0
      %1070 = vmatpush1.bf16.xpose.msra.mxu0 0
      %1071 = vmatprep.subr.bf16.mxu0 0
      %1072 = vmatpush1.bf16.xpose.msra.mxu0 0
      %1073 = vmatprep.subr.bf16.mxu0 0
      %1074 = vmatpush1.bf16.xpose.msra.mxu0 0
      %1075 = vmatprep.subr.bf16.mxu0 0
      %1076 = vmatpush1.bf16.xpose.msra.mxu0 0
      %1077 = vmatprep.subr.bf16.mxu0 0
      %1078 = vmatpush1.bf16.xpose.msra.mxu0 0
      %1079 = vmatprep.subr.bf16.mxu0 0
      %1080 = vmatpush1.bf16.xpose.msra.mxu0 0
      %1081 = vmatprep.subr.bf16.mxu0 0
      %1082 = vmatpush1.bf16.xpose.msra.mxu0 0
      %1083 = vmatprep.subr.bf16.mxu0 0
      %1084 = vmatpush1.bf16.xpose.msra.mxu0 0
      %1085 = vmatprep.mubr.bf16.mxu0 0
      %1086 = vmatmul.mubr.bf16.gmra.mrb[0].mxu0 %v1042
      %v1087 = vpop.f32.mrb[0].mxu0
      %v1088 = vadd.f32 %v497, %v1087
      %v1089 = vpop.f32.mrb[0].mxu0
      %v1090 = vpop.f32.mrb[0].mxu0
      %v1091 = vadd.f32 %v498, %v1090
      %v1092 = vpop.f32.mrb[0].mxu0
      %1093 = vmatprep.mubr.bf16.mxu0 0
      %1094 = vmatmul.mubr.bf16.gmra.mrb[0].mxu0 %v1045
      %v1095 = vpop.f32.mrb[0].mxu0
      %v1096 = vadd.f32 %v499, %v1095
      %v1097 = vpop.f32.mrb[0].mxu0
      %v1098 = vpop.f32.mrb[0].mxu0
      %v1099 = vpop.f32.mrb[0].mxu0
      %1100 = vdwg.mxu0
      %v1101 = vsel %vm649, %v1088, -inf
      %1102 = vmax.xlane.f32.xlu0 %v1101
      %v1103 = vpop.xlane.xlu0 %1102
      %v1104 = vsel %vm649, %v1091, -inf
      %1105 = vmax.xlane.f32.xlu0 %v1104
      %v1106 = vpop.xlane.xlu0 %1105
      %v1107 = vsel %vm649, %v1096, -inf
      %1108 = vmax.xlane.f32.xlu0 %v1107
      %v1109 = vpop.xlane.xlu0 %1108
      %v1110 = vsub.f32 %v1088, %v1103
      %v1111 = vsub.f32 %v1091, %v1106
      %v1112 = vsub.f32 %v1096, %v1109
      %v1113 = vmul.f32 %v1110, 1.442695
      %v1114 = vpow.pop %v1113
      %v1115 = vmul.f32 %v1111, 1.442695
      %v1116 = vpow.pop %v1115
      %v1117 = vmul.f32 %v1112, 1.442695
      %v1118 = vpow.pop %v1117
      %v1119 = vsel %vm649, %v1114, 0.0
      %1120 = vadd.xlane.f32.xlu0 %v1119
      %v1121 = vpop.xlane.xlu0 %1120
      %v1122 = vsel %vm649, %v1116, 0.0
      %1123 = vadd.xlane.f32.xlu0 %v1122
      %v1124 = vpop.xlane.xlu0 %1123
      %v1125 = vsel %vm649, %v1118, 0.0
      %1126 = vadd.xlane.f32.xlu0 %v1125
      %v1127 = vpop.xlane.xlu0 %1126
      %v1128 = vrcp.pop %v1121
      %v1129 = vrcp.pop %v1124
      %v1130 = vrcp.pop %v1127
      %v1131 = vmul.f32 %v1114, %v1128
      %v1132 = vmul.f32 %v1116, %v1129
      %v1133 = vmul.f32 %v1118, %v1130
      %v1134 = vpack.c.bf16 %v1132, %v1131
      %v1135 = vpack.c.bf16 %v1133, %v1133
      %1136 = vrot.lane.b32.xlu0 %v580, 48
      %v1137 = vpop.permute.xlu0 %1136
      %1138 = vrot.lane.b32.xlu0 %v581, 48
      %v1139 = vpop.permute.xlu0 %1138
      %v1142 = vsel %vm649, %v1134, 0
      %v1145 = vsel %vm649, %v1135, 0
      %v1148 = vsel %vm696, %v1139, 0
      %1150 = vmatprep.subr.bf16.mxu0 0
      %1151 = vmatpush1.bf16.msra.mxu0 %v1137
      %1152 = vmatprep.subr.bf16.mxu0 0
      %1153 = vmatpush1.bf16.msra.mxu0 %v1148
      %1154 = vmatprep.subr.bf16.mxu0 0
      %1155 = vmatpush1.bf16.msra.mxu0 0
      %1156 = vmatprep.subr.bf16.mxu0 0
      %1157 = vmatpush1.bf16.msra.mxu0 0
      %1158 = vmatprep.subr.bf16.mxu0 0
      %1159 = vmatpush1.bf16.msra.mxu0 0
      %1160 = vmatprep.subr.bf16.mxu0 0
      %1161 = vmatpush1.bf16.msra.mxu0 0
      %1162 = vmatprep.subr.bf16.mxu0 0
      %1163 = vmatpush1.bf16.msra.mxu0 0
      %1164 = vmatprep.subr.bf16.mxu0 0
      %1165 = vmatpush1.bf16.msra.mxu0 0
      %1166 = vmatprep.subr.bf16.mxu0 0
      %1167 = vmatpush1.bf16.msra.mxu0 0
      %1168 = vmatprep.subr.bf16.mxu0 0
      %1169 = vmatpush1.bf16.msra.mxu0 0
      %1170 = vmatprep.subr.bf16.mxu0 0
      %1171 = vmatpush1.bf16.msra.mxu0 0
      %1172 = vmatprep.subr.bf16.mxu0 0
      %1173 = vmatpush1.bf16.msra.mxu0 0
      %1174 = vmatprep.subr.bf16.mxu0 0
      %1175 = vmatpush1.bf16.msra.mxu0 0
      %1176 = vmatprep.subr.bf16.mxu0 0
      %1177 = vmatpush1.bf16.msra.mxu0 0
      %1178 = vmatprep.subr.bf16.mxu0 0
      %1179 = vmatpush1.bf16.msra.mxu0 0
      %1180 = vmatprep.subr.bf16.mxu0 0
      %1181 = vmatpush1.bf16.msra.mxu0 0
      %1182 = vmatprep.mubr.bf16.mxu0 0
      %1183 = vmatmul.mubr.bf16.gmra.mrb[0].mxu0 %v1142
      %v1184 = vpop.f32.mrb[0].mxu0
      %v1185 = vadd.f32 0.0, %v1184
      %v1186 = vpop.f32.mrb[0].mxu0
      %v1187 = vpop.f32.mrb[0].mxu0
      %v1188 = vadd.f32 0.0, %v1187
      %v1189 = vpop.f32.mrb[0].mxu0
      %1190 = vmatprep.mubr.bf16.mxu0 0
      %1191 = vmatmul.mubr.bf16.gmra.mrb[0].mxu0 %v1145
      %v1192 = vpop.f32.mrb[0].mxu0
      %v1193 = vadd.f32 0.0, %v1192
      %v1194 = vpop.f32.mrb[0].mxu0
      %v1195 = vpop.f32.mrb[0].mxu0
      %v1196 = vpop.f32.mrb[0].mxu0
      %1197 = vdwg.mxu0
      %v1198 = vpack.c.bf16 %v1188, %v1185
      %v1199 = vpack.c.bf16 %v1193, %v1193
      %v1200 = vld [vmem:[%s4 + $0x8] sm:$0xf]
      %v1202 = vsel %vm588, %v1198, 0
      %v1205 = vsel %vm588, %v1199, 0
      %v1208 = vsel %vm696, %v1200, 0
      %1210 = vmatprep.subr.bf16.mxu0 0
      %1211 = vmatpush1.bf16.msra.mxu0 %v1208
      %1212 = vmatprep.subr.bf16.mxu0 0
      %1213 = vmatpush1.bf16.msra.mxu0 0
      %1214 = vmatprep.subr.bf16.mxu0 0
      %1215 = vmatpush1.bf16.msra.mxu0 0
      %1216 = vmatprep.subr.bf16.mxu0 0
      %1217 = vmatpush1.bf16.msra.mxu0 0
      %1218 = vmatprep.subr.bf16.mxu0 0
      %1219 = vmatpush1.bf16.msra.mxu0 0
      %1220 = vmatprep.subr.bf16.mxu0 0
      %1221 = vmatpush1.bf16.msra.mxu0 0
      %1222 = vmatprep.subr.bf16.mxu0 0
      %1223 = vmatpush1.bf16.msra.mxu0 0
      %1224 = vmatprep.subr.bf16.mxu0 0
      %1225 = vmatpush1.bf16.msra.mxu0 0
      %1226 = vmatprep.subr.bf16.mxu0 0
      %1227 = vmatpush1.bf16.msra.mxu0 0
      %1228 = vmatprep.subr.bf16.mxu0 0
      %1229 = vmatpush1.bf16.msra.mxu0 0
      %1230 = vmatprep.subr.bf16.mxu0 0
      %1231 = vmatpush1.bf16.msra.mxu0 0
      %1232 = vmatprep.subr.bf16.mxu0 0
      %1233 = vmatpush1.bf16.msra.mxu0 0
      %1234 = vmatprep.subr.bf16.mxu0 0
      %1235 = vmatpush1.bf16.msra.mxu0 0
      %1236 = vmatprep.subr.bf16.mxu0 0
      %1237 = vmatpush1.bf16.msra.mxu0 0
      %1238 = vmatprep.subr.bf16.mxu0 0
      %1239 = vmatpush1.bf16.msra.mxu0 0
      %1240 = vmatprep.subr.bf16.mxu0 0
      %1241 = vmatpush1.bf16.msra.mxu0 0
      %1242 = vmatprep.mubr.bf16.mxu0 0
      %1243 = vmatmul.mubr.bf16.gmra.mrb[0].mxu0 %v1202
      %v1244 = vpop.f32.mrb[0].mxu0
      %v1245 = vadd.f32 0.0, %v1244
      %v1246 = vpop.f32.mrb[0].mxu0
      %v1247 = vpop.f32.mrb[0].mxu0
      %v1248 = vadd.f32 0.0, %v1247
      %v1249 = vpop.f32.mrb[0].mxu0
      %1250 = vmatprep.mubr.bf16.mxu0 0
      %1251 = vmatmul.mubr.bf16.gmra.mrb[0].mxu0 %v1205
      %v1252 = vpop.f32.mrb[0].mxu0
      %v1253 = vadd.f32 0.0, %v1252
      %v1254 = vpop.f32.mrb[0].mxu0
      %v1255 = vpop.f32.mrb[0].mxu0
      %v1256 = vpop.f32.mrb[0].mxu0
      %1257 = vdwg.mxu0
      %v1258 = vadd.f32 %v1020, %v1245
      %v1259 = vadd.f32 %v1023, %v1248
      %v1260 = vadd.f32 %v1028, %v1253
      %1261 = vrot.lane.b32.xlu0 %v580, 104
      %v1262 = vpop.permute.xlu0 %1261
      %1263 = vrot.lane.b32.xlu0 %v581, 104
      %v1264 = vpop.permute.xlu0 %1263
      %1265 = vrot.lane.b32.xlu0 %v580, 72
      %v1266 = vpop.permute.xlu0 %1265
      %1267 = vrot.lane.b32.xlu0 %v581, 72
      %v1268 = vpop.permute.xlu0 %1267
      %v1270 = vsel %vm588, %v1262, 0
      %v1273 = vsel %vm588, %v1264, 0
      %v1276 = vsel %vm588, %v1266, 0
      %v1279 = vsel %vm588, %v1268, 0
      %1281 = vmatprep.subr.bf16.mxu0 0
      %1282 = vmatpush1.bf16.xpose.msra.mxu0 %v1276
      %1283 = vmatprep.subr.bf16.mxu0 0
      %1284 = vmatpush1.bf16.xpose.msra.mxu0 %v1279
      %1285 = vmatprep.subr.bf16.mxu0 0
      %1286 = vmatpush1.bf16.xpose.msra.mxu0 0
      %1287 = vmatprep.subr.bf16.mxu0 0
      %1288 = vmatpush1.bf16.xpose.msra.mxu0 0
      %1289 = vmatprep.subr.bf16.mxu0 0
      %1290 = vmatpush1.bf16.xpose.msra.mxu0 0
      %1291 = vmatprep.subr.bf16.mxu0 0
      %1292 = vmatpush1.bf16.xpose.msra.mxu0 0
      %1293 = vmatprep.subr.bf16.mxu0 0
      %1294 = vmatpush1.bf16.xpose.msra.mxu0 0
      %1295 = vmatprep.subr.bf16.mxu0 0
      %1296 = vmatpush1.bf16.xpose.msra.mxu0 0
      %1297 = vmatprep.subr.bf16.mxu0 0
      %1298 = vmatpush1.bf16.xpose.msra.mxu0 0
      %1299 = vmatprep.subr.bf16.mxu0 0
      %1300 = vmatpush1.bf16.xpose.msra.mxu0 0
      %1301 = vmatprep.subr.bf16.mxu0 0
      %1302 = vmatpush1.bf16.xpose.msra.mxu0 0
      %1303 = vmatprep.subr.bf16.mxu0 0
      %1304 = vmatpush1.bf16.xpose.msra.mxu0 0
      %1305 = vmatprep.subr.bf16.mxu0 0
      %1306 = vmatpush1.bf16.xpose.msra.mxu0 0
      %1307 = vmatprep.subr.bf16.mxu0 0
      %1308 = vmatpush1.bf16.xpose.msra.mxu0 0
      %1309 = vmatprep.subr.bf16.mxu0 0
      %1310 = vmatpush1.bf16.xpose.msra.mxu0 0
      %1311 = vmatprep.subr.bf16.mxu0 0
      %1312 = vmatpush1.bf16.xpose.msra.mxu0 0
      %1313 = vmatprep.mubr.bf16.mxu0 0
      %1314 = vmatmul.mubr.bf16.gmra.mrb[0].mxu0 %v1270
      %v1315 = vpop.f32.mrb[0].mxu0
      %v1316 = vadd.f32 %v497, %v1315
      %v1317 = vpop.f32.mrb[0].mxu0
      %v1318 = vpop.f32.mrb[0].mxu0
      %v1319 = vadd.f32 %v498, %v1318
      %v1320 = vpop.f32.mrb[0].mxu0
      %1321 = vmatprep.mubr.bf16.mxu0 0
      %1322 = vmatmul.mubr.bf16.gmra.mrb[0].mxu0 %v1273
      %v1323 = vpop.f32.mrb[0].mxu0
      %v1324 = vadd.f32 %v499, %v1323
      %v1325 = vpop.f32.mrb[0].mxu0
      %v1326 = vpop.f32.mrb[0].mxu0
      %v1327 = vpop.f32.mrb[0].mxu0
      %1328 = vdwg.mxu0
      %v1329 = vsel %vm649, %v1316, -inf
      %1330 = vmax.xlane.f32.xlu0 %v1329
      %v1331 = vpop.xlane.xlu0 %1330
      %v1332 = vsel %vm649, %v1319, -inf
      %1333 = vmax.xlane.f32.xlu0 %v1332
      %v1334 = vpop.xlane.xlu0 %1333
      %v1335 = vsel %vm649, %v1324, -inf
      %1336 = vmax.xlane.f32.xlu0 %v1335
      %v1337 = vpop.xlane.xlu0 %1336
      %v1338 = vsub.f32 %v1316, %v1331
      %v1339 = vsub.f32 %v1319, %v1334
      %v1340 = vsub.f32 %v1324, %v1337
      %v1341 = vmul.f32 %v1338, 1.442695
      %v1342 = vpow.pop %v1341
      %v1343 = vmul.f32 %v1339, 1.442695
      %v1344 = vpow.pop %v1343
      %v1345 = vmul.f32 %v1340, 1.442695
      %v1346 = vpow.pop %v1345
      %v1347 = vsel %vm649, %v1342, 0.0
      %1348 = vadd.xlane.f32.xlu0 %v1347
      %v1349 = vpop.xlane.xlu0 %1348
      %v1350 = vsel %vm649, %v1344, 0.0
      %1351 = vadd.xlane.f32.xlu0 %v1350
      %v1352 = vpop.xlane.xlu0 %1351
      %v1353 = vsel %vm649, %v1346, 0.0
      %1354 = vadd.xlane.f32.xlu0 %v1353
      %v1355 = vpop.xlane.xlu0 %1354
      %v1356 = vrcp.pop %v1349
      %v1357 = vrcp.pop %v1352
      %v1358 = vrcp.pop %v1355
      %v1359 = vmul.f32 %v1342, %v1356
      %v1360 = vmul.f32 %v1344, %v1357
      %v1361 = vmul.f32 %v1346, %v1358
      %v1362 = vpack.c.bf16 %v1360, %v1359
      %v1363 = vpack.c.bf16 %v1361, %v1361
      %1364 = vrot.lane.b32.xlu0 %v580, 40
      %v1365 = vpop.permute.xlu0 %1364
      %1366 = vrot.lane.b32.xlu0 %v581, 40
      %v1367 = vpop.permute.xlu0 %1366
      %v1370 = vsel %vm649, %v1362, 0
      %v1373 = vsel %vm649, %v1363, 0
      %v1376 = vsel %vm696, %v1367, 0
      %1378 = vmatprep.subr.bf16.mxu0 0
      %1379 = vmatpush1.bf16.msra.mxu0 %v1365
      %1380 = vmatprep.subr.bf16.mxu0 0
      %1381 = vmatpush1.bf16.msra.mxu0 %v1376
      %1382 = vmatprep.subr.bf16.mxu0 0
      %1383 = vmatpush1.bf16.msra.mxu0 0
      %1384 = vmatprep.subr.bf16.mxu0 0
      %1385 = vmatpush1.bf16.msra.mxu0 0
      %1386 = vmatprep.subr.bf16.mxu0 0
      %1387 = vmatpush1.bf16.msra.mxu0 0
      %1388 = vmatprep.subr.bf16.mxu0 0
      %1389 = vmatpush1.bf16.msra.mxu0 0
      %1390 = vmatprep.subr.bf16.mxu0 0
      %1391 = vmatpush1.bf16.msra.mxu0 0
      %1392 = vmatprep.subr.bf16.mxu0 0
      %1393 = vmatpush1.bf16.msra.mxu0 0
      %1394 = vmatprep.subr.bf16.mxu0 0
      %1395 = vmatpush1.bf16.msra.mxu0 0
      %1396 = vmatprep.subr.bf16.mxu0 0
      %1397 = vmatpush1.bf16.msra.mxu0 0
      %1398 = vmatprep.subr.bf16.mxu0 0
      %1399 = vmatpush1.bf16.msra.mxu0 0
      %1400 = vmatprep.subr.bf16.mxu0 0
      %1401 = vmatpush1.bf16.msra.mxu0 0
      %1402 = vmatprep.subr.bf16.mxu0 0
      %1403 = vmatpush1.bf16.msra.mxu0 0
      %1404 = vmatprep.subr.bf16.mxu0 0
      %1405 = vmatpush1.bf16.msra.mxu0 0
      %1406 = vmatprep.subr.bf16.mxu0 0
      %1407 = vmatpush1.bf16.msra.mxu0 0
      %1408 = vmatprep.subr.bf16.mxu0 0
      %1409 = vmatpush1.bf16.msra.mxu0 0
      %1410 = vmatprep.mubr.bf16.mxu0 0
      %1411 = vmatmul.mubr.bf16.gmra.mrb[0].mxu0 %v1370
      %v1412 = vpop.f32.mrb[0].mxu0
      %v1413 = vadd.f32 0.0, %v1412
      %v1414 = vpop.f32.mrb[0].mxu0
      %v1415 = vpop.f32.mrb[0].mxu0
      %v1416 = vadd.f32 0.0, %v1415
      %v1417 = vpop.f32.mrb[0].mxu0
      %1418 = vmatprep.mubr.bf16.mxu0 0
      %1419 = vmatmul.mubr.bf16.gmra.mrb[0].mxu0 %v1373
      %v1420 = vpop.f32.mrb[0].mxu0
      %v1421 = vadd.f32 0.0, %v1420
      %v1422 = vpop.f32.mrb[0].mxu0
      %v1423 = vpop.f32.mrb[0].mxu0
      %v1424 = vpop.f32.mrb[0].mxu0
      %1425 = vdwg.mxu0
      %v1426 = vpack.c.bf16 %v1416, %v1413
      %v1427 = vpack.c.bf16 %v1421, %v1421
      %v1428 = vld [vmem:[%s4 + $0xc] sm:$0xf]
      %v1430 = vsel %vm588, %v1426, 0
      %v1433 = vsel %vm588, %v1427, 0
      %v1436 = vsel %vm696, %v1428, 0
      %1438 = vmatprep.subr.bf16.mxu0 0
      %1439 = vmatpush1.bf16.msra.mxu0 %v1436
      %1440 = vmatprep.subr.bf16.mxu0 0
      %1441 = vmatpush1.bf16.msra.mxu0 0
      %1442 = vmatprep.subr.bf16.mxu0 0
      %1443 = vmatpush1.bf16.msra.mxu0 0
      %1444 = vmatprep.subr.bf16.mxu0 0
      %1445 = vmatpush1.bf16.msra.mxu0 0
      %1446 = vmatprep.subr.bf16.mxu0 0
      %1447 = vmatpush1.bf16.msra.mxu0 0
      %1448 = vmatprep.subr.bf16.mxu0 0
      %1449 = vmatpush1.bf16.msra.mxu0 0
      %1450 = vmatprep.subr.bf16.mxu0 0
      %1451 = vmatpush1.bf16.msra.mxu0 0
      %1452 = vmatprep.subr.bf16.mxu0 0
      %1453 = vmatpush1.bf16.msra.mxu0 0
      %1454 = vmatprep.subr.bf16.mxu0 0
      %1455 = vmatpush1.bf16.msra.mxu0 0
      %1456 = vmatprep.subr.bf16.mxu0 0
      %1457 = vmatpush1.bf16.msra.mxu0 0
      %1458 = vmatprep.subr.bf16.mxu0 0
      %1459 = vmatpush1.bf16.msra.mxu0 0
      %1460 = vmatprep.subr.bf16.mxu0 0
      %1461 = vmatpush1.bf16.msra.mxu0 0
      %1462 = vmatprep.subr.bf16.mxu0 0
      %1463 = vmatpush1.bf16.msra.mxu0 0
      %1464 = vmatprep.subr.bf16.mxu0 0
      %1465 = vmatpush1.bf16.msra.mxu0 0
      %1466 = vmatprep.subr.bf16.mxu0 0
      %1467 = vmatpush1.bf16.msra.mxu0 0
      %1468 = vmatprep.subr.bf16.mxu0 0
      %1469 = vmatpush1.bf16.msra.mxu0 0
      %1470 = vmatprep.mubr.bf16.mxu0 0
      %1471 = vmatmul.mubr.bf16.gmra.mrb[0].mxu0 %v1430
      %v1472 = vpop.f32.mrb[0].mxu0
      %v1473 = vadd.f32 0.0, %v1472
      %v1474 = vpop.f32.mrb[0].mxu0
      %v1475 = vpop.f32.mrb[0].mxu0
      %v1476 = vadd.f32 0.0, %v1475
      %v1477 = vpop.f32.mrb[0].mxu0
      %1478 = vmatprep.mubr.bf16.mxu0 0
      %1479 = vmatmul.mubr.bf16.gmra.mrb[0].mxu0 %v1433
      %v1480 = vpop.f32.mrb[0].mxu0
      %v1481 = vadd.f32 0.0, %v1480
      %v1482 = vpop.f32.mrb[0].mxu0
      %v1483 = vpop.f32.mrb[0].mxu0
      %v1484 = vpop.f32.mrb[0].mxu0
      %1485 = vdwg.mxu0
      %v1486 = vadd.f32 %v1258, %v1473
      %v1487 = vadd.f32 %v1259, %v1476
      %v1488 = vadd.f32 %v1260, %v1481
      %v1489 = vld [vmem:[%s5] sm:$0x1]
      %v1491 = vlaneseq
      %v1492 = vshrl.u32 %v1491, 7
      %v1493 = vsub.s32 0, %v1492
      %v1494 = vrot.slane %v1489, %v1493
      %v1496 = vadd.f32 %v1486, %v1494
      %v1497 = vadd.f32 %v1487, %v1494
      %v1498 = vadd.f32 %v1488, %v1494
      %v1499 = vadd.f32 %v494, %v1496
      %v1500 = vadd.f32 %v495, %v1497
      %v1501 = vadd.f32 %v496, %v1498
      %v1502 = vld [vmem:[%s6] sm:$0x1]
      %v1503 = vld [vmem:[%s7] sm:$0x1]
      %v1504 = vsel %vm525, %v1499, 0.0
      %1505 = vadd.xlane.f32.xlu0 %v1504
      %v1506 = vpop.xlane.xlu0 %1505
      %v1507 = vsel %vm525, %v1500, 0.0
      %1508 = vadd.xlane.f32.xlu0 %v1507
      %v1509 = vpop.xlane.xlu0 %1508
      %v1510 = vsel %vm525, %v1501, 0.0
      %1511 = vadd.xlane.f32.xlu0 %v1510
      %v1512 = vpop.xlane.xlu0 %1511
      %v1513 = vrcp.pop 32.0
      %v1514 = vmul.f32 %v1506, %v1513
      %v1515 = vmul.f32 %v1509, %v1513
      %v1516 = vmul.f32 %v1512, %v1513
      %v1517 = vsub.f32 %v1499, %v1514
      %v1518 = vsub.f32 %v1500, %v1515
      %v1519 = vsub.f32 %v1501, %v1516
      %v1520 = vmul.f32 %v1517, %v1517
      %v1521 = vmul.f32 %v1518, %v1518
      %v1522 = vmul.f32 %v1519, %v1519
      %v1523 = vsel %vm525, %v1520, 0.0
      %1524 = vadd.xlane.f32.xlu0 %v1523
      %v1525 = vpop.xlane.xlu0 %1524
      %v1526 = vsel %vm525, %v1521, 0.0
      %1527 = vadd.xlane.f32.xlu0 %v1526
      %v1528 = vpop.xlane.xlu0 %1527
      %v1529 = vsel %vm525, %v1522, 0.0
      %1530 = vadd.xlane.f32.xlu0 %v1529
      %v1531 = vpop.xlane.xlu0 %1530
      %v1532 = vmul.f32 %v1525, %v1513
      %v1533 = vmul.f32 %v1528, %v1513
      %v1534 = vmul.f32 %v1531, %v1513
      %v1535 = vadd.f32 %v1532, 1e-05
      %v1536 = vadd.f32 %v1533, 1e-05
      %v1537 = vadd.f32 %v1534, 1e-05
      %v1538 = vrsqrt.pop %v1535
      %v1539 = vrsqrt.pop %v1536
      %v1540 = vrsqrt.pop %v1537
      %v1541 = vmul.f32 %v1517, %v1538
      %v1542 = vmul.f32 %v1518, %v1539
      %v1543 = vmul.f32 %v1519, %v1540
      %v1545 = vlaneseq
      %v1546 = vshrl.u32 %v1545, 7
      %v1547 = vsub.s32 0, %v1546
      %v1548 = vrot.slane %v1502, %v1547
      %v1550 = vmul.f32 %v1541, %v1548
      %v1551 = vmul.f32 %v1542, %v1548
      %v1552 = vmul.f32 %v1543, %v1548
      %v1554 = vlaneseq
      %v1555 = vshrl.u32 %v1554, 7
      %v1556 = vsub.s32 0, %v1555
      %v1557 = vrot.slane %v1503, %v1556
      %v1559 = vadd.f32 %v1550, %v1557
      %v1560 = vadd.f32 %v1551, %v1557
      %v1561 = vadd.f32 %v1552, %v1557
      %v1562 = vpack.c.bf16 %v1560, %v1559
      %v1563 = vpack.c.bf16 %v1561, %v1561
      %v1564 = vld [vmem:[%s8] sm:$0xf]
      %v1565 = vld [vmem:[%s8 + $0x4] sm:$0xf]
      %v1566 = vld [vmem:[%s8 + $0x8] sm:$0xf]
      %v1567 = vld [vmem:[%s8 + $0xc] sm:$0xf]
      %v1568 = vld [vmem:[%s9] sm:$0x1]
      %v1570 = vlaneseq
      %v1571 = vshrl.u32 %v1570, 7
      %v1572 = vsub.s32 0, %v1571
      %v1573 = vrot.slane %v1568, %v1572
      %v1579 = vunpack.c.l.b16 %v1564
      %v1580 = vunpack.c.l.b16 %v1565
      %v1581 = vunpack.c.l.b16 %v1566
      %v1582 = vunpack.c.l.b16 %v1567
      %v1583 = vpack.c.b16 %v1580, %v1579
      %v1584 = vpack.c.b16 %v1582, %v1581
      %v1588 = vsel %vm525, %v1562, 0
      %v1591 = vsel %vm525, %v1563, 0
      %1593 = vmatprep.subr.bf16.mxu0 0
      %1594 = vmatpush1.bf16.msra.mxu0 %v1583
      %1595 = vmatprep.subr.bf16.mxu0 0
      %1596 = vmatpush1.bf16.msra.mxu0 %v1584
      %1597 = vmatprep.subr.bf16.mxu0 0
      %1598 = vmatpush1.bf16.msra.mxu0 0
      %1599 = vmatprep.subr.bf16.mxu0 0
      %1600 = vmatpush1.bf16.msra.mxu0 0
      %1601 = vmatprep.subr.bf16.mxu0 0
      %1602 = vmatpush1.bf16.msra.mxu0 0
      %1603 = vmatprep.subr.bf16.mxu0 0
      %1604 = vmatpush1.bf16.msra.mxu0 0
      %1605 = vmatprep.subr.bf16.mxu0 0
      %1606 = vmatpush1.bf16.msra.mxu0 0
      %1607 = vmatprep.subr.bf16.mxu0 0
      %1608 = vmatpush1.bf16.msra.mxu0 0
      %1609 = vmatprep.subr.bf16.mxu0 0
      %1610 = vmatpush1.bf16.msra.mxu0 0
      %1611 = vmatprep.subr.bf16.mxu0 0
      %1612 = vmatpush1.bf16.msra.mxu0 0
      %1613 = vmatprep.subr.bf16.mxu0 0
      %1614 = vmatpush1.bf16.msra.mxu0 0
      %1615 = vmatprep.subr.bf16.mxu0 0
      %1616 = vmatpush1.bf16.msra.mxu0 0
      %1617 = vmatprep.subr.bf16.mxu0 0
      %1618 = vmatpush1.bf16.msra.mxu0 0
      %1619 = vmatprep.subr.bf16.mxu0 0
      %1620 = vmatpush1.bf16.msra.mxu0 0
      %1621 = vmatprep.subr.bf16.mxu0 0
      %1622 = vmatpush1.bf16.msra.mxu0 0
      %1623 = vmatprep.subr.bf16.mxu0 0
      %1624 = vmatpush1.bf16.msra.mxu0 0
      %1625 = vmatprep.mubr.bf16.mxu0 0
      %1626 = vmatmul.mubr.bf16.gmra.mrb[0].mxu0 %v1588
      %v1627 = vpop.f32.mrb[0].mxu0
      %v1628 = vadd.f32 %v1573, %v1627
      %v1629 = vpop.f32.mrb[0].mxu0
      %v1630 = vpop.f32.mrb[0].mxu0
      %v1631 = vadd.f32 %v1573, %v1630
      %v1632 = vpop.f32.mrb[0].mxu0
      %1633 = vmatprep.mubr.bf16.mxu0 0
      %1634 = vmatmul.mubr.bf16.gmra.mrb[0].mxu0 %v1591
      %v1635 = vpop.f32.mrb[0].mxu0
      %v1636 = vadd.f32 %v1573, %v1635
      %v1637 = vpop.f32.mrb[0].mxu0
      %v1638 = vpop.f32.mrb[0].mxu0
      %v1639 = vpop.f32.mrb[0].mxu0
      %1640 = vdwg.mxu0
      %v1641 = vmax.f32 %v1628, 0.0
      %v1642 = vmax.f32 %v1631, 0.0
      %v1643 = vmax.f32 %v1636, 0.0
      %v1644 = vpack.c.bf16 %v1642, %v1641
      %v1645 = vpack.c.bf16 %v1643, %v1643
      %v1646 = vld [vmem:[%s10] sm:$0xf]
      %v1647 = vld [vmem:[%s10 + $0x4] sm:$0xf]
      %v1648 = vld [vmem:[%s10 + $0x8] sm:$0xf]
      %v1649 = vld [vmem:[%s10 + $0xc] sm:$0xf]
      %v1650 = vld [vmem:[%s10 + $0x10] sm:$0xf]
      %v1651 = vld [vmem:[%s10 + $0x14] sm:$0xf]
      %v1652 = vld [vmem:[%s10 + $0x18] sm:$0xf]
      %v1653 = vld [vmem:[%s10 + $0x1c] sm:$0xf]
      %v1654 = vld [vmem:[%s11] sm:$0x1]
      %v1656 = vlaneseq
      %v1657 = vshrl.u32 %v1656, 7
      %v1658 = vsub.s32 0, %v1657
      %v1659 = vrot.slane %v1654, %v1658
      %v1669 = vunpack.c.l.b16 %v1646
      %v1670 = vunpack.c.l.b16 %v1647
      %v1671 = vunpack.c.l.b16 %v1648
      %v1672 = vunpack.c.l.b16 %v1649
      %v1673 = vunpack.c.l.b16 %v1650
      %v1674 = vunpack.c.l.b16 %v1651
      %v1675 = vunpack.c.l.b16 %v1652
      %v1676 = vunpack.c.l.b16 %v1653
      %v1677 = vpack.c.b16 %v1670, %v1669
      %v1678 = vpack.c.b16 %v1672, %v1671
      %v1679 = vpack.c.b16 %v1674, %v1673
      %v1680 = vpack.c.b16 %v1676, %v1675
      %vm1685 = vcmask 523264
      %v1687 = vsel %vm1685, %v1644, 0
      %v1690 = vsel %vm1685, %v1645, 0
      %1692 = vmatprep.subr.bf16.mxu0 0
      %1693 = vmatpush1.bf16.msra.mxu0 %v1677
      %1694 = vmatprep.subr.bf16.mxu0 0
      %1695 = vmatpush1.bf16.msra.mxu0 %v1678
      %1696 = vmatprep.subr.bf16.mxu0 0
      %1697 = vmatpush1.bf16.msra.mxu0 %v1679
      %1698 = vmatprep.subr.bf16.mxu0 0
      %1699 = vmatpush1.bf16.msra.mxu0 %v1680
      %1700 = vmatprep.subr.bf16.mxu0 0
      %1701 = vmatpush1.bf16.msra.mxu0 0
      %1702 = vmatprep.subr.bf16.mxu0 0
      %1703 = vmatpush1.bf16.msra.mxu0 0
      %1704 = vmatprep.subr.bf16.mxu0 0
      %1705 = vmatpush1.bf16.msra.mxu0 0
      %1706 = vmatprep.subr.bf16.mxu0 0
      %1707 = vmatpush1.bf16.msra.mxu0 0
      %1708 = vmatprep.subr.bf16.mxu0 0
      %1709 = vmatpush1.bf16.msra.mxu0 0
      %1710 = vmatprep.subr.bf16.mxu0 0
      %1711 = vmatpush1.bf16.msra.mxu0 0
      %1712 = vmatprep.subr.bf16.mxu0 0
      %1713 = vmatpush1.bf16.msra.mxu0 0
      %1714 = vmatprep.subr.bf16.mxu0 0
      %1715 = vmatpush1.bf16.msra.mxu0 0
      %1716 = vmatprep.subr.bf16.mxu0 0
      %1717 = vmatpush1.bf16.msra.mxu0 0
      %1718 = vmatprep.subr.bf16.mxu0 0
      %1719 = vmatpush1.bf16.msra.mxu0 0
      %1720 = vmatprep.subr.bf16.mxu0 0
      %1721 = vmatpush1.bf16.msra.mxu0 0
      %1722 = vmatprep.subr.bf16.mxu0 0
      %1723 = vmatpush1.bf16.msra.mxu0 0
      %1724 = vmatprep.mubr.bf16.mxu0 0
      %1725 = vmatmul.mubr.bf16.gmra.mrb[0].mxu0 %v1687
      %v1726 = vpop.f32.mrb[0].mxu0
      %v1727 = vadd.f32 %v1659, %v1726
      %v1728 = vpop.f32.mrb[0].mxu0
      %v1729 = vpop.f32.mrb[0].mxu0
      %v1730 = vadd.f32 %v1659, %v1729
      %v1731 = vpop.f32.mrb[0].mxu0
      %1732 = vmatprep.mubr.bf16.mxu0 0
      %1733 = vmatmul.mubr.bf16.gmra.mrb[0].mxu0 %v1690
      %v1734 = vpop.f32.mrb[0].mxu0
      %v1735 = vadd.f32 %v1659, %v1734
      %v1736 = vpop.f32.mrb[0].mxu0
      %v1737 = vpop.f32.mrb[0].mxu0
      %v1738 = vpop.f32.mrb[0].mxu0
      %1739 = vdwg.mxu0
      %v1740 = vadd.f32 %v1559, %v1727
      %v1741 = vadd.f32 %v1560, %v1730
      %v1742 = vadd.f32 %v1561, %v1735
      %v1743 = vld [vmem:[%s12] sm:$0x1]
      %v1744 = vld [vmem:[%s13] sm:$0x1]
      %v1745 = vsel %vm525, %v1740, 0.0
      %1746 = vadd.xlane.f32.xlu0 %v1745
      %v1747 = vpop.xlane.xlu0 %1746
      %v1748 = vsel %vm525, %v1741, 0.0
      %1749 = vadd.xlane.f32.xlu0 %v1748
      %v1750 = vpop.xlane.xlu0 %1749
      %v1751 = vsel %vm525, %v1742, 0.0
      %1752 = vadd.xlane.f32.xlu0 %v1751
      %v1753 = vpop.xlane.xlu0 %1752
      %v1754 = vmul.f32 %v1747, %v1513
      %v1755 = vmul.f32 %v1750, %v1513
      %v1756 = vmul.f32 %v1753, %v1513
      %v1757 = vsub.f32 %v1740, %v1754
      %v1758 = vsub.f32 %v1741, %v1755
      %v1759 = vsub.f32 %v1742, %v1756
      %v1760 = vmul.f32 %v1757, %v1757
      %v1761 = vmul.f32 %v1758, %v1758
      %v1762 = vmul.f32 %v1759, %v1759
      %v1763 = vsel %vm525, %v1760, 0.0
      %1764 = vadd.xlane.f32.xlu0 %v1763
      %v1765 = vpop.xlane.xlu0 %1764
      %v1766 = vsel %vm525, %v1761, 0.0
      %1767 = vadd.xlane.f32.xlu0 %v1766
      %v1768 = vpop.xlane.xlu0 %1767
      %v1769 = vsel %vm525, %v1762, 0.0
      %1770 = vadd.xlane.f32.xlu0 %v1769
      %v1771 = vpop.xlane.xlu0 %1770
      %v1772 = vmul.f32 %v1765, %v1513
      %v1773 = vmul.f32 %v1768, %v1513
      %v1774 = vmul.f32 %v1771, %v1513
      %v1775 = vadd.f32 %v1772, 1e-05
      %v1776 = vadd.f32 %v1773, 1e-05
      %v1777 = vadd.f32 %v1774, 1e-05
      %v1778 = vrsqrt.pop %v1775
      %v1779 = vrsqrt.pop %v1776
      %v1780 = vrsqrt.pop %v1777
      %v1781 = vmul.f32 %v1757, %v1778
      %v1782 = vmul.f32 %v1758, %v1779
      %v1783 = vmul.f32 %v1759, %v1780
      %v1785 = vlaneseq
      %v1786 = vshrl.u32 %v1785, 7
      %v1787 = vsub.s32 0, %v1786
      %v1788 = vrot.slane %v1743, %v1787
      %v1790 = vmul.f32 %v1781, %v1788
      %v1791 = vmul.f32 %v1782, %v1788
      %v1792 = vmul.f32 %v1783, %v1788
      %v1794 = vlaneseq
      %v1795 = vshrl.u32 %v1794, 7
      %v1796 = vsub.s32 0, %v1795
      %v1797 = vrot.slane %v1744, %v1796
      %v1799 = vadd.f32 %v1790, %v1797
      %v1800 = vadd.f32 %v1791, %v1797
      %v1801 = vadd.f32 %v1792, %v1797
      %1802 = vst.msk [vmem:[%s491] sm:$0xff] %vm525, %v1799
      %1803 = vst.msk [vmem:[%s491 + $0x8] sm:$0xff] %vm525, %v1800
      %1804 = vst.msk [vmem:[%s491 + $0x10] sm:$0xff] %vm525, %v1801
      %s1805 = smul.u32 3, %s25
      %p1806 = scmp.lt.s32.totalorder %s1805, 14
      %s1807 = scalar_select %p1806, %s1805, 14
      %s1808 = smul.addr %s1807, 8
      %s1809 = scalar_lea.vmem %s14, %s1808
      // Predicated region
      $region77: #{pirt_forward.3} parent=75 // pred_check
        %p1810 = pneg %p347
      $region78: #{pirt_forward.3} parent=75 // pred_check_branch
        %1812 = sbr.rel (%p1810) target = $region80
      $region79: #{pirt_forward.3} parent=75 // pred_region
        %s1813 = smul.u32 3, %s25
      $region80: #{pirt_forward.3} parent=75 // pred_fallthru
        _
    $region76: #{pirt_forward.3} parent=5 // pred_fallthru
      _
    %p1814 = scmp.le.s32.totalorder 2, %s20
    // Predicated region
    $region81: #{pirt_forward.3} parent=5 // pred_check
      %p1815 = pneg %p1814
    $region82: #{pirt_forward.3} parent=5 // pred_check_branch
      %1817 = sbr.rel (%p1815) target = $region84
    $region83: #{pirt_forward.3} parent=5 // pred_region
      %s1818 = ssub.s32 %s20, 2
      // Predicated region
      $region85: #{pirt_forward.3} parent=83 // pred_check
        %p1819 = pneg %p353
      $region86: #{pirt_forward.3} parent=83 // pred_check_branch
        %1821 = sbr.rel (%p1819) target = $region88
      $region87: #{pirt_forward.3} parent=83 // pred_region
        %s1822 = smul.u32 3, %s26
        %p1823 = scmp.lt.s32.totalorder %s1822, 14
        %s1824 = scalar_select %p1823, %s1822, 14
        %s1825 = smul.addr %s1824, 8
        %s1826 = scalar_lea.vmem %s14, %s1825
      $region88: #{pirt_forward.3} parent=83 // pred_fallthru
        _
    $region84: #{pirt_forward.3} parent=5 // pred_fallthru
      _
  $region6: #{pirt_forward.3} parent=0 // loop_footer
    %s24 = sadd.s32 1, %s20
  $region7: #{pirt_forward.3} parent=0 // loop_footer_branch
    %19 = sbr.rel target = $region3
  $region8: #{pirt_forward.3} parent=0 // loop_exit
    _

</llo_original>
